<compile_context>
chip_gen: v7x
topology: tpu7x:2x2x1
jax: 0.10.0
libtpu: 0.0.40
codegen_flags: <defaults>
</compile_context>

<pallas_src>
import functools

import jax
import jax.numpy as jnp
from jax.experimental import pallas as pl
from jax.experimental.pallas import tpu as pltpu


# ----------------------------------------------------------------------------
# helpers
# ----------------------------------------------------------------------------

def _pick_tile(n, target):
    """Largest tile <= target that divides n; fall back to full extent."""
    if n <= target:
        return n
    t = target
    while t >= 8:
        if n % t == 0:
            return t
        t //= 2
    return n


# ----------------------------------------------------------------------------
# Pallas kernels
# ----------------------------------------------------------------------------

def _mha_kernel(xq_ref, xkv_ref, wq_ref, bq_ref, wkv_ref, bkv_ref, m_ref,
                o_ref, *, H, dk, dv, scale):
    """Fused Q-proj + KV-proj + multi-head attention for one batch element.

    xq:  (1, Sq, D)  bf16    wq:  (D, H*dk)       bf16   bq:  (1, H*dk)     f32
    xkv: (1, Sk, D)  bf16    wkv: (D, H*(dk+dv))  bf16   bkv: (1, H*(dk+dv)) f32
    m:   (1, Sq, Sk) f32     out: (1, Sq, H*dv)   bf16
    """
    xq = xq_ref[0]                       # (Sq, D) bf16
    xkv = xkv_ref[0]                     # (Sk, D) bf16
    mask = m_ref[0]                      # (Sq, Sk) f32

    # Projections: contraction over full D -> good MXU width; f32 accumulate.
    q = jnp.dot(xq, wq_ref[...], preferred_element_type=jnp.float32) + bq_ref[...]
    kv = jnp.dot(xkv, wkv_ref[...], preferred_element_type=jnp.float32) + bkv_ref[...]

    neg = jnp.float32(-1e9)
    ctx_heads = []
    for h in range(H):                   # static unroll over heads
        # Scale q (Sq*dk elems) instead of the score matrix (Sq*Sk elems).
        qh = (q[:, h * dk:(h + 1) * dk] * scale).astype(jnp.bfloat16)   # (Sq, dk)
        kh = kv[:, h * dk:(h + 1) * dk].astype(jnp.bfloat16)            # (Sk, dk)
        vh = kv[:, H * dk + h * dv: H * dk + (h + 1) * dv].astype(jnp.bfloat16)

        s = jnp.einsum("qd,kd->qk", qh, kh,
                       preferred_element_type=jnp.float32)              # (Sq, Sk)
        s = jnp.where(mask > 0, s, neg)
        s = s - jnp.max(s, axis=-1, keepdims=True)
        p = jnp.exp(s)
        denom = jnp.sum(p, axis=-1, keepdims=True)
        p = p * pl.reciprocal(denom, approx=True)                       # EUP divide

        ctx_heads.append(jnp.dot(p.astype(jnp.bfloat16), vh,
                                 preferred_element_type=jnp.float32))   # (Sq, dv)

    ctx = jnp.concatenate(ctx_heads, axis=-1)                           # (Sq, H*dv)
    o_ref[0] = ctx.astype(o_ref.dtype)


def mha_attention(xq, xkv, mask, wq, bq, wkv, bkv, head, d_k, d_v):
    B, Sq, D = xq.shape
    Sk = xkv.shape[1]
    Hdk = head * d_k
    Hdv = head * d_v
    Hdkv = head * (d_k + d_v)
    kern = functools.partial(_mha_kernel, H=head, dk=d_k, dv=d_v,
                             scale=1.0 / (d_k ** 0.5))
    return pl.pallas_call(
        kern,
        out_shape=jax.ShapeDtypeStruct((B, Sq, Hdv), jnp.bfloat16),
        grid=(B,),
        in_specs=[
            pl.BlockSpec((1, Sq, D), lambda b: (b, 0, 0)),
            pl.BlockSpec((1, Sk, D), lambda b: (b, 0, 0)),
            pl.BlockSpec((D, Hdk), lambda b: (0, 0)),     # weights: constant block,
            pl.BlockSpec((1, Hdk), lambda b: (0, 0)),     # fetched once, not per-head
            pl.BlockSpec((D, Hdkv), lambda b: (0, 0)),
            pl.BlockSpec((1, Hdkv), lambda b: (0, 0)),
            pl.BlockSpec((1, Sq, Sk), lambda b: (b, 0, 0)),
        ],
        out_specs=pl.BlockSpec((1, Sq, Hdv), lambda b: (b, 0, 0)),
        compiler_params=pltpu.CompilerParams(dimension_semantics=("parallel",)),
    )(xq, xkv, wq, bq, wkv, bkv, mask)


def _proj_add_ln_kernel(ctx_ref, w_ref, b_ref, res_ref, g_ref, bt_ref, o_ref,
                        *, eps):
    """Fused: out = LayerNorm(ctx @ w + b + residual)."""
    o = jnp.dot(ctx_ref[...], w_ref[...],
                preferred_element_type=jnp.float32) + b_ref[...]
    y = o + res_ref[...].astype(jnp.float32)
    mu = jnp.mean(y, axis=-1, keepdims=True)
    var = jnp.mean((y - mu) ** 2, axis=-1, keepdims=True)
    out = (y - mu) * jax.lax.rsqrt(var + eps) * g_ref[...] + bt_ref[...]
    o_ref[...] = out.astype(o_ref.dtype)


def proj_add_ln(ctx2d, w, b, res2d, gamma, beta, eps=1e-5):
    M, K = ctx2d.shape
    D = w.shape[1]
    tm = _pick_tile(M, 256)
    kern = functools.partial(_proj_add_ln_kernel, eps=eps)
    return pl.pallas_call(
        kern,
        out_shape=jax.ShapeDtypeStruct((M, D), jnp.bfloat16),
        grid=(M // tm,),
        in_specs=[
            pl.BlockSpec((tm, K), lambda i: (i, 0)),
            pl.BlockSpec((K, D), lambda i: (0, 0)),
            pl.BlockSpec((1, D), lambda i: (0, 0)),
            pl.BlockSpec((tm, D), lambda i: (i, 0)),
            pl.BlockSpec((1, D), lambda i: (0, 0)),
            pl.BlockSpec((1, D), lambda i: (0, 0)),
        ],
        out_specs=pl.BlockSpec((tm, D), lambda i: (i, 0)),
        compiler_params=pltpu.CompilerParams(dimension_semantics=("parallel",)),
    )(ctx2d, w, b, res2d, gamma, beta)


def _ffn_add_ln_kernel(x_ref, w1_ref, b1_ref, w2_ref, b2_ref, g_ref, bt_ref,
                       o_ref, acc_ref, *, eps):
    """Fused FFN + residual + LayerNorm, d_ff tiled on the reduction grid axis."""
    j = pl.program_id(1)

    @pl.when(j == 0)
    def _():
        acc_ref[...] = jnp.zeros_like(acc_ref)

    x = x_ref[...]                                                 # (tm, D) bf16
    h = jnp.dot(x, w1_ref[...], preferred_element_type=jnp.float32) + b1_ref[...]
    h = jnp.maximum(h, 0.0).astype(jnp.bfloat16)                   # (tm, tf)
    acc_ref[...] += jnp.dot(h, w2_ref[...], preferred_element_type=jnp.float32)

    @pl.when(j == pl.num_programs(1) - 1)
    def _():
        y = acc_ref[...] + b2_ref[...] + x.astype(jnp.float32)     # residual = x
        mu = jnp.mean(y, axis=-1, keepdims=True)
        var = jnp.mean((y - mu) ** 2, axis=-1, keepdims=True)
        out = (y - mu) * jax.lax.rsqrt(var + eps) * g_ref[...] + bt_ref[...]
        o_ref[...] = out.astype(o_ref.dtype)


def ffn_add_ln(x2d, w1, b1, w2, b2, gamma, beta, eps=1e-5):
    M, D = x2d.shape
    dff = w1.shape[1]
    tm = _pick_tile(M, 256)
    tf = _pick_tile(dff, 512)
    kern = functools.partial(_ffn_add_ln_kernel, eps=eps)
    return pl.pallas_call(
        kern,
        out_shape=jax.ShapeDtypeStruct((M, D), jnp.bfloat16),
        grid=(M // tm, dff // tf),
        in_specs=[
            pl.BlockSpec((tm, D), lambda i, j: (i, 0)),
            pl.BlockSpec((D, tf), lambda i, j: (0, j)),
            pl.BlockSpec((1, tf), lambda i, j: (0, j)),
            pl.BlockSpec((tf, D), lambda i, j: (j, 0)),
            pl.BlockSpec((1, D), lambda i, j: (0, 0)),
            pl.BlockSpec((1, D), lambda i, j: (0, 0)),
            pl.BlockSpec((1, D), lambda i, j: (0, 0)),
        ],
        out_specs=pl.BlockSpec((tm, D), lambda i, j: (i, 0)),
        scratch_shapes=[pltpu.VMEM((tm, D), jnp.float32)],
        compiler_params=pltpu.CompilerParams(
            dimension_semantics=("parallel", "arbitrary"),
            vmem_limit_bytes=48 * 1024 * 1024,
        ),
    )(x2d, w1, b1, w2, b2, gamma, beta)


def _ln_kernel(x_ref, g_ref, b_ref, o_ref, *, eps):
    y = x_ref[...].astype(jnp.float32)
    mu = jnp.mean(y, axis=-1, keepdims=True)
    var = jnp.mean((y - mu) ** 2, axis=-1, keepdims=True)
    o_ref[...] = ((y - mu) * jax.lax.rsqrt(var + eps) * g_ref[...]
                  + b_ref[...]).astype(o_ref.dtype)


def layernorm(x2d, gamma, beta, eps=1e-5):
    M, D = x2d.shape
    tm = _pick_tile(M, 512)
    kern = functools.partial(_ln_kernel, eps=eps)
    return pl.pallas_call(
        kern,
        out_shape=jax.ShapeDtypeStruct((M, D), jnp.float32),
        grid=(M // tm,),
        in_specs=[
            pl.BlockSpec((tm, D), lambda i: (i, 0)),
            pl.BlockSpec((1, D), lambda i: (0, 0)),
            pl.BlockSpec((1, D), lambda i: (0, 0)),
        ],
        out_specs=pl.BlockSpec((tm, D), lambda i: (i, 0)),
        compiler_params=pltpu.CompilerParams(dimension_semantics=("parallel",)),
    )(x2d, gamma, beta)


# ----------------------------------------------------------------------------
# Model glue (parameter setup + layer wiring)
# ----------------------------------------------------------------------------

def _uniform(key, shape, fan_in, dtype):
    bound = 1.0 / (fan_in ** 0.5)
    return jax.random.uniform(key, shape, jnp.float32, -bound, bound).astype(dtype)


def init_decoder_params(key, head, d_model, d_k, d_v, d_ff, n_layers):
    ks = jax.random.split(key, 12)

    def attn_params(k0, k1, k2):
        return {
            # Concatenated K|V projection -> one matmul instead of two.
            "wq": _uniform(k0, (d_model, head * d_k), d_model, jnp.bfloat16),
            "bq": _uniform(jax.random.fold_in(k0, 1), (1, head * d_k),
                           d_model, jnp.float32),
            "wkv": _uniform(k1, (d_model, head * (d_k + d_v)), d_model,
                            jnp.bfloat16),
            "bkv": _uniform(jax.random.fold_in(k1, 1),
                            (1, head * (d_k + d_v)), d_model, jnp.float32),
            "wfc": _uniform(k2, (head * d_v, d_model), head * d_v, jnp.bfloat16),
            "bfc": _uniform(jax.random.fold_in(k2, 1), (1, d_model),
                            head * d_v, jnp.float32),
            "ln_g": jnp.ones((1, d_model), jnp.float32),
            "ln_b": jnp.zeros((1, d_model), jnp.float32),
        }

    # One DecoderLayer's parameters — `clone` deep-copies the SAME initialised
    # layer, so every layer in the stack shares identical initial weights.
    layer = {
        "slf": attn_params(ks[0], ks[1], ks[2]),
        "enc": attn_params(ks[3], ks[4], ks[5]),
        "ffn": {
            "w1": _uniform(ks[6], (d_model, d_ff), d_model, jnp.bfloat16),
            "b1": _uniform(ks[7], (1, d_ff), d_model, jnp.float32),
            "w2": _uniform(ks[8], (d_ff, d_model), d_ff, jnp.bfloat16),
            "b2": _uniform(ks[9], (1, d_model), d_ff, jnp.float32),
            "ln_g": jnp.ones((1, d_model), jnp.float32),
            "ln_b": jnp.zeros((1, d_model), jnp.float32),
        },
    }
    return {
        "layers": [layer for _ in range(n_layers)],
        "final_ln_g": jnp.ones((1, d_model), jnp.float32),
        "final_ln_b": jnp.zeros((1, d_model), jnp.float32),
    }


def mha_block(p, xq, xkv, mask, head, d_k, d_v):
    # xq: (B, Sq, D) bf16   xkv: (B, Sk, D) bf16   mask: (B, Sq, Sk) f32
    B, Sq, D = xq.shape
    ctx = mha_attention(xq, xkv, mask, p["wq"], p["bq"], p["wkv"], p["bkv"],
                        head, d_k, d_v)                       # (B, Sq, H*dv)
    out2d = proj_add_ln(ctx.reshape(B * Sq, head * d_v), p["wfc"], p["bfc"],
                        xq.reshape(B * Sq, D), p["ln_g"], p["ln_b"])
    return out2d.reshape(B, Sq, D)


def decoder_forward(params, enc_output, dec_input, slf_attn_mask,
                    enc_dec_attn_mask, head, d_k, d_v, d_model):
    x = dec_input.astype(jnp.bfloat16)
    enc = enc_output.astype(jnp.bfloat16)
    slf_mask = slf_attn_mask.astype(jnp.float32)
    ed_mask = enc_dec_attn_mask.astype(jnp.float32)

    for lp in params["layers"]:
        x = mha_block(lp["slf"], x, x, slf_mask, head, d_k, d_v)
        x = mha_block(lp["enc"], x, enc, ed_mask, head, d_k, d_v)
        B, S, D = x.shape
        fp = lp["ffn"]
        x = ffn_add_ln(x.reshape(B * S, D), fp["w1"], fp["b1"], fp["w2"],
                       fp["b2"], fp["ln_g"], fp["ln_b"]).reshape(B, S, D)

    B, S, D = x.shape
    out = layernorm(x.reshape(B * S, D), params["final_ln_g"],
                    params["final_ln_b"])
    return out.reshape(B, S, D)


# ----------------------------------------------------------------------------
# Driver
# ----------------------------------------------------------------------------

if __name__ == "__main__":
    B, S = 2, 8
    head, d_model, d_k, d_v, d_ff, n_layers = 4, 32, 8, 8, 64, 2

    key = jax.random.PRNGKey(0)
    k_enc, k_dec, k_par = jax.random.split(key, 3)

    enc_output = jax.random.normal(k_enc, (B, S, d_model), jnp.float32)
    dec_input = jax.random.normal(k_dec, (B, S, d_model), jnp.float32)

    # Self-attention mask: causal (1 = attend). Enc-dec mask: all ones.
    causal = jnp.tril(jnp.ones((S, S), jnp.float32))
    slf_attn_mask = jnp.broadcast_to(causal, (B, S, S))
    enc_dec_attn_mask = jnp.ones((B, S, S), jnp.float32)

    params = init_decoder_params(k_par, head, d_model, d_k, d_v, d_ff, n_layers)

    fwd = jax.jit(functools.partial(decoder_forward, head=head, d_k=d_k,
                                    d_v=d_v, d_model=d_model))
    out = fwd(params, enc_output, dec_input, slf_attn_mask, enc_dec_attn_mask)
    out = jax.block_until_ready(out)

    assert out.shape == (B, S, d_model)
    assert jnp.all(jnp.isfinite(out))
    print("KERNEL_OK")
</pallas_src>

<mosaic_0001>
module attributes {stable_mosaic.version = 11 : i64} {
  func.func @_proj_add_ln_kernel(%arg0: i32, %arg1: memref<16x32xbf16, #tpu.memory_space<vmem>>, %arg2: memref<32x32xbf16, #tpu.memory_space<vmem>>, %arg3: memref<1x32xf32, #tpu.memory_space<vmem>>, %arg4: memref<16x32xbf16, #tpu.memory_space<vmem>>, %arg5: memref<1x32xf32, #tpu.memory_space<vmem>>, %arg6: memref<1x32xf32, #tpu.memory_space<vmem>>, %arg7: memref<16x32xbf16, #tpu.memory_space<vmem>>) attributes {dimension_semantics = [#tpu.dimension_semantics<parallel>], iteration_bounds = array<i64: 1>, scalar_prefetch = 0 : i64, scratch_operands = 0 : i64, tpu.core_type = #tpu.core_type<tc>, window_params = [{transform_indices = @transform_0, window_bounds = array<i64: 16, 32>}, {pipeline_mode = #tpu.pipeline_mode<synchronous>, transform_indices = @transform_1, window_bounds = array<i64: 32, 32>}, {pipeline_mode = #tpu.pipeline_mode<synchronous>, transform_indices = @transform_2, window_bounds = array<i64: 1, 32>}, {transform_indices = @transform_3, window_bounds = array<i64: 16, 32>}, {pipeline_mode = #tpu.pipeline_mode<synchronous>, transform_indices = @transform_4, window_bounds = array<i64: 1, 32>}, {pipeline_mode = #tpu.pipeline_mode<synchronous>, transform_indices = @transform_5, window_bounds = array<i64: 1, 32>}, {transform_indices = @transform_6, window_bounds = array<i64: 16, 32>}]} {
    %c0 = arith.constant 0 : index
    %c0_0 = arith.constant 0 : index
    %0 = vector.load %arg1[%c0, %c0_0] : memref<16x32xbf16, #tpu.memory_space<vmem>>, vector<16x32xbf16>
    %c0_1 = arith.constant 0 : index
    %c0_2 = arith.constant 0 : index
    %1 = vector.load %arg2[%c0_1, %c0_2] : memref<32x32xbf16, #tpu.memory_space<vmem>>, vector<32x32xbf16>
    %cst = arith.constant dense<0.000000e+00> : vector<16x32xf32>
    %2 = tpu.matmul %0, %1, %cst {dimension_numbers = #tpu.dot_dimension_numbers<[1], [0], [0], [1], [0, 0, 1, 1], [], []>} : vector<16x32xbf16>, vector<32x32xbf16>, vector<16x32xf32> -> vector<16x32xf32>
    %c0_3 = arith.constant 0 : index
    %c0_4 = arith.constant 0 : index
    %3 = vector.load %arg3[%c0_3, %c0_4] : memref<1x32xf32, #tpu.memory_space<vmem>>, vector<1x32xf32>
    %4 = vector.broadcast %3 : vector<1x32xf32> to vector<16x32xf32>
    %5 = arith.addf %2, %4 : vector<16x32xf32>
    %c0_5 = arith.constant 0 : index
    %c0_6 = arith.constant 0 : index
    %6 = vector.load %arg4[%c0_5, %c0_6] : memref<16x32xbf16, #tpu.memory_space<vmem>>, vector<16x32xbf16>
    %7 = arith.extf %6 : vector<16x32xbf16> to vector<16x32xf32>
    %8 = arith.addf %5, %7 : vector<16x32xf32>
    %cst_7 = arith.constant dense<0.000000e+00> : vector<16xf32>
    %9 = vector.multi_reduction <add>, %8, %cst_7 [1] : vector<16x32xf32> to vector<16xf32>
    %10 = vector.shape_cast %9 : vector<16xf32> to vector<16x1xf32>
    %cst_8 = arith.constant 3.200000e+01 : f32
    %11 = vector.broadcast %cst_8 : f32 to vector<16x1xf32>
    %12 = arith.divf %10, %11 : vector<16x1xf32>
    %13 = vector.broadcast %12 : vector<16x1xf32> to vector<16x32xf32>
    %14 = arith.subf %8, %13 : vector<16x32xf32>
    %15 = arith.mulf %14, %14 : vector<16x32xf32>
    %cst_9 = arith.constant dense<0.000000e+00> : vector<16xf32>
    %16 = vector.multi_reduction <add>, %15, %cst_9 [1] : vector<16x32xf32> to vector<16xf32>
    %17 = vector.shape_cast %16 : vector<16xf32> to vector<16x1xf32>
    %cst_10 = arith.constant 3.200000e+01 : f32
    %18 = vector.broadcast %cst_10 : f32 to vector<16x1xf32>
    %19 = arith.divf %17, %18 : vector<16x1xf32>
    %20 = vector.broadcast %12 : vector<16x1xf32> to vector<16x32xf32>
    %21 = arith.subf %8, %20 : vector<16x32xf32>
    %cst_11 = arith.constant 9.99999974E-6 : f32
    %22 = vector.broadcast %cst_11 : f32 to vector<16x1xf32>
    %23 = arith.addf %19, %22 : vector<16x1xf32>
    %24 = math.rsqrt %23 : vector<16x1xf32>
    %25 = vector.broadcast %24 : vector<16x1xf32> to vector<16x32xf32>
    %26 = arith.mulf %21, %25 : vector<16x32xf32>
    %c0_12 = arith.constant 0 : index
    %c0_13 = arith.constant 0 : index
    %27 = vector.load %arg5[%c0_12, %c0_13] : memref<1x32xf32, #tpu.memory_space<vmem>>, vector<1x32xf32>
    %28 = vector.broadcast %27 : vector<1x32xf32> to vector<16x32xf32>
    %29 = arith.mulf %26, %28 : vector<16x32xf32>
    %c0_14 = arith.constant 0 : index
    %c0_15 = arith.constant 0 : index
    %30 = vector.load %arg6[%c0_14, %c0_15] : memref<1x32xf32, #tpu.memory_space<vmem>>, vector<1x32xf32>
    %31 = vector.broadcast %30 : vector<1x32xf32> to vector<16x32xf32>
    %32 = arith.addf %29, %31 : vector<16x32xf32>
    %33 = arith.truncf %32 : vector<16x32xf32> to vector<16x32xbf16>
    %c0_16 = arith.constant 0 : index
    %c0_17 = arith.constant 0 : index
    %34 = vector.load %arg7[%c0_16, %c0_17] : memref<16x32xbf16, #tpu.memory_space<vmem>>, vector<16x32xbf16>
    tpu.vector_store %arg7[%c0_16, %c0_17], %33 {strides = array<i32>} : memref<16x32xbf16, #tpu.memory_space<vmem>>, vector<16x32xbf16>,
    return
  }
  func.func @transform_0(%arg0: i32) -> (i32, i32) {
    %c0_i32 = arith.constant 0 : i32
    %c0_i32_0 = arith.constant 0 : i32
    return %arg0, %c0_i32 : i32, i32
  }
  func.func @transform_1(%arg0: i32) -> (i32, i32) {
    %c0_i32 = arith.constant 0 : i32
    %c0_i32_0 = arith.constant 0 : i32
    %c0_i32_1 = arith.constant 0 : i32
    return %c0_i32, %c0_i32_0 : i32, i32
  }
  func.func @transform_2(%arg0: i32) -> (i32, i32) {
    %c0_i32 = arith.constant 0 : i32
    %c0_i32_0 = arith.constant 0 : i32
    %c0_i32_1 = arith.constant 0 : i32
    return %c0_i32, %c0_i32_0 : i32, i32
  }
  func.func @transform_3(%arg0: i32) -> (i32, i32) {
    %c0_i32 = arith.constant 0 : i32
    %c0_i32_0 = arith.constant 0 : i32
    return %arg0, %c0_i32 : i32, i32
  }
  func.func @transform_4(%arg0: i32) -> (i32, i32) {
    %c0_i32 = arith.constant 0 : i32
    %c0_i32_0 = arith.constant 0 : i32
    %c0_i32_1 = arith.constant 0 : i32
    return %c0_i32, %c0_i32_0 : i32, i32
  }
  func.func @transform_5(%arg0: i32) -> (i32, i32) {
    %c0_i32 = arith.constant 0 : i32
    %c0_i32_0 = arith.constant 0 : i32
    %c0_i32_1 = arith.constant 0 : i32
    return %c0_i32, %c0_i32_0 : i32, i32
  }
  func.func @transform_6(%arg0: i32) -> (i32, i32) {
    %c0_i32 = arith.constant 0 : i32
    %c0_i32_0 = arith.constant 0 : i32
    return %arg0, %c0_i32 : i32, i32
  }
}

module attributes {stable_mosaic.version = 11 : i64} {
  func.func @_mha_kernel(%arg0: i32, %arg1: memref<1x8x32xbf16, #tpu.memory_space<vmem>>, %arg2: memref<1x8x32xbf16, #tpu.memory_space<vmem>>, %arg3: memref<32x32xbf16, #tpu.memory_space<vmem>>, %arg4: memref<1x32xf32, #tpu.memory_space<vmem>>, %arg5: memref<32x64xbf16, #tpu.memory_space<vmem>>, %arg6: memref<1x64xf32, #tpu.memory_space<vmem>>, %arg7: memref<1x8x8xf32, #tpu.memory_space<vmem>>, %arg8: memref<1x8x32xbf16, #tpu.memory_space<vmem>>) attributes {dimension_semantics = [#tpu.dimension_semantics<parallel>], iteration_bounds = array<i64: 2>, scalar_prefetch = 0 : i64, scratch_operands = 0 : i64, tpu.core_type = #tpu.core_type<tc>, window_params = [{transform_indices = @transform_0, window_bounds = array<i64: 1, 8, 32>}, {transform_indices = @transform_1, window_bounds = array<i64: 1, 8, 32>}, {pipeline_mode = #tpu.pipeline_mode<synchronous>, transform_indices = @transform_2, window_bounds = array<i64: 32, 32>}, {pipeline_mode = #tpu.pipeline_mode<synchronous>, transform_indices = @transform_3, window_bounds = array<i64: 1, 32>}, {pipeline_mode = #tpu.pipeline_mode<synchronous>, transform_indices = @transform_4, window_bounds = array<i64: 32, 64>}, {pipeline_mode = #tpu.pipeline_mode<synchronous>, transform_indices = @transform_5, window_bounds = array<i64: 1, 64>}, {transform_indices = @transform_6, window_bounds = array<i64: 1, 8, 8>}, {transform_indices = @transform_7, window_bounds = array<i64: 1, 8, 32>}]} {
    %c0 = arith.constant 0 : index
    %c0_0 = arith.constant 0 : index
    %c0_1 = arith.constant 0 : index
    %0 = vector.load %arg1[%c0, %c0_0, %c0_1] : memref<1x8x32xbf16, #tpu.memory_space<vmem>>, vector<1x8x32xbf16>
    %1 = vector.shape_cast %0 : vector<1x8x32xbf16> to vector<8x32xbf16>
    %c0_2 = arith.constant 0 : index
    %c0_3 = arith.constant 0 : index
    %c0_4 = arith.constant 0 : index
    %2 = vector.load %arg2[%c0_2, %c0_3, %c0_4] : memref<1x8x32xbf16, #tpu.memory_space<vmem>>, vector<1x8x32xbf16>
    %3 = vector.shape_cast %2 : vector<1x8x32xbf16> to vector<8x32xbf16>
    %c0_5 = arith.constant 0 : index
    %c0_6 = arith.constant 0 : index
    %c0_7 = arith.constant 0 : index
    %4 = vector.load %arg7[%c0_5, %c0_6, %c0_7] : memref<1x8x8xf32, #tpu.memory_space<vmem>>, vector<1x8x8xf32>
    %5 = vector.shape_cast %4 : vector<1x8x8xf32> to vector<8x8xf32>
    %c0_8 = arith.constant 0 : index
    %c0_9 = arith.constant 0 : index
    %6 = vector.load %arg3[%c0_8, %c0_9] : memref<32x32xbf16, #tpu.memory_space<vmem>>, vector<32x32xbf16>
    %cst = arith.constant dense<0.000000e+00> : vector<8x32xf32>
    %7 = tpu.matmul %1, %6, %cst {dimension_numbers = #tpu.dot_dimension_numbers<[1], [0], [0], [1], [0, 0, 1, 1], [], []>} : vector<8x32xbf16>, vector<32x32xbf16>, vector<8x32xf32> -> vector<8x32xf32>
    %c0_10 = arith.constant 0 : index
    %c0_11 = arith.constant 0 : index
    %8 = vector.load %arg4[%c0_10, %c0_11] : memref<1x32xf32, #tpu.memory_space<vmem>>, vector<1x32xf32>
    %9 = vector.broadcast %8 : vector<1x32xf32> to vector<8x32xf32>
    %10 = arith.addf %7, %9 : vector<8x32xf32>
    %c0_12 = arith.constant 0 : index
    %c0_13 = arith.constant 0 : index
    %11 = vector.load %arg5[%c0_12, %c0_13] : memref<32x64xbf16, #tpu.memory_space<vmem>>, vector<32x64xbf16>
    %cst_14 = arith.constant dense<0.000000e+00> : vector<8x64xf32>
    %12 = tpu.matmul %3, %11, %cst_14 {dimension_numbers = #tpu.dot_dimension_numbers<[1], [0], [0], [1], [0, 0, 1, 1], [], []>} : vector<8x32xbf16>, vector<32x64xbf16>, vector<8x64xf32> -> vector<8x64xf32>
    %c0_15 = arith.constant 0 : index
    %c0_16 = arith.constant 0 : index
    %13 = vector.load %arg6[%c0_15, %c0_16] : memref<1x64xf32, #tpu.memory_space<vmem>>, vector<1x64xf32>
    %14 = vector.broadcast %13 : vector<1x64xf32> to vector<8x64xf32>
    %15 = arith.addf %12, %14 : vector<8x64xf32>
    %16 = vector.extract_strided_slice %10 {offsets = [0, 0], sizes = [8, 8], strides = [1, 1]} : vector<8x32xf32> to vector<8x8xf32>
    %cst_17 = arith.constant 0.353553385 : f32
    %17 = vector.broadcast %cst_17 : f32 to vector<8x8xf32>
    %18 = arith.mulf %16, %17 : vector<8x8xf32>
    %19 = arith.truncf %18 : vector<8x8xf32> to vector<8x8xbf16>
    %20 = vector.extract_strided_slice %15 {offsets = [0, 0], sizes = [8, 8], strides = [1, 1]} : vector<8x64xf32> to vector<8x8xf32>
    %21 = arith.truncf %20 : vector<8x8xf32> to vector<8x8xbf16>
    %22 = vector.extract_strided_slice %15 {offsets = [0, 32], sizes = [8, 8], strides = [1, 1]} : vector<8x64xf32> to vector<8x8xf32>
    %23 = arith.truncf %22 : vector<8x8xf32> to vector<8x8xbf16>
    "tpu.trace_start"() <{level = 10 : i32, message = "qd,kd->qk"}> : () -> ()
    %cst_18 = arith.constant dense<0.000000e+00> : vector<8x8xf32>
    %24 = tpu.matmul %19, %21, %cst_18 {dimension_numbers = #tpu.dot_dimension_numbers<[1], [1], [0], [0], [0, 0, 1, 0], [], []>} : vector<8x8xbf16>, vector<8x8xbf16>, vector<8x8xf32> -> vector<8x8xf32>
    %cst_19 = arith.constant 0.000000e+00 : f32
    "tpu.trace_stop"() : () -> ()
    %25 = vector.broadcast %cst_19 : f32 to vector<8x8xf32>
    %26 = arith.cmpf ogt, %5, %25 : vector<8x8xf32>
    %cst_20 = arith.constant -1.000000e+09 : f32
    %27 = vector.broadcast %cst_20 : f32 to vector<8x8xf32>
    %28 = arith.select %26, %24, %27 : vector<8x8xi1>, vector<8x8xf32>
    %cst_21 = arith.constant dense<0xFF800000> : vector<8xf32>
    %29 = vector.multi_reduction <maximumf>, %28, %cst_21 [1] : vector<8x8xf32> to vector<8xf32>
    %30 = vector.shape_cast %29 : vector<8xf32> to vector<8x1xf32>
    %31 = vector.broadcast %30 : vector<8x1xf32> to vector<8x8xf32>
    %32 = arith.subf %28, %31 : vector<8x8xf32>
    %33 = math.exp %32 : vector<8x8xf32>
    %cst_22 = arith.constant dense<0.000000e+00> : vector<8xf32>
    %34 = vector.multi_reduction <add>, %33, %cst_22 [1] : vector<8x8xf32> to vector<8xf32>
    %35 = vector.shape_cast %34 : vector<8xf32> to vector<8x1xf32>
    %36 = tpu.reciprocal %35 {approx = true} : vector<8x1xf32> -> vector<8x1xf32>
    %37 = vector.broadcast %36 : vector<8x1xf32> to vector<8x8xf32>
    %38 = arith.mulf %33, %37 : vector<8x8xf32>
    %39 = arith.truncf %38 : vector<8x8xf32> to vector<8x8xbf16>
    %cst_23 = arith.constant dense<0.000000e+00> : vector<8x8xf32>
    %40 = tpu.matmul %39, %23, %cst_23 {dimension_numbers = #tpu.dot_dimension_numbers<[1], [0], [0], [1], [0, 0, 1, 1], [], []>} : vector<8x8xbf16>, vector<8x8xbf16>, vector<8x8xf32> -> vector<8x8xf32>
    %41 = vector.extract_strided_slice %10 {offsets = [0, 8], sizes = [8, 8], strides = [1, 1]} : vector<8x32xf32> to vector<8x8xf32>
    %cst_24 = arith.constant 0.353553385 : f32
    %42 = vector.broadcast %cst_24 : f32 to vector<8x8xf32>
    %43 = arith.mulf %41, %42 : vector<8x8xf32>
    %44 = arith.truncf %43 : vector<8x8xf32> to vector<8x8xbf16>
    %45 = vector.extract_strided_slice %15 {offsets = [0, 8], sizes = [8, 8], strides = [1, 1]} : vector<8x64xf32> to vector<8x8xf32>
    %46 = arith.truncf %45 : vector<8x8xf32> to vector<8x8xbf16>
    %47 = vector.extract_strided_slice %15 {offsets = [0, 40], sizes = [8, 8], strides = [1, 1]} : vector<8x64xf32> to vector<8x8xf32>
    %48 = arith.truncf %47 : vector<8x8xf32> to vector<8x8xbf16>
    "tpu.trace_start"() <{level = 10 : i32, message = "qd,kd->qk"}> : () -> ()
    %cst_25 = arith.constant dense<0.000000e+00> : vector<8x8xf32>
    %49 = tpu.matmul %44, %46, %cst_25 {dimension_numbers = #tpu.dot_dimension_numbers<[1], [1], [0], [0], [0, 0, 1, 0], [], []>} : vector<8x8xbf16>, vector<8x8xbf16>, vector<8x8xf32> -> vector<8x8xf32>
    %cst_26 = arith.constant 0.000000e+00 : f32
    "tpu.trace_stop"() : () -> ()
    %50 = vector.broadcast %cst_26 : f32 to vector<8x8xf32>
    %51 = arith.cmpf ogt, %5, %50 : vector<8x8xf32>
    %cst_27 = arith.constant -1.000000e+09 : f32
    %52 = vector.broadcast %cst_27 : f32 to vector<8x8xf32>
    %53 = arith.select %51, %49, %52 : vector<8x8xi1>, vector<8x8xf32>
    %cst_28 = arith.constant dense<0xFF800000> : vector<8xf32>
    %54 = vector.multi_reduction <maximumf>, %53, %cst_28 [1] : vector<8x8xf32> to vector<8xf32>
    %55 = vector.shape_cast %54 : vector<8xf32> to vector<8x1xf32>
    %56 = vector.broadcast %55 : vector<8x1xf32> to vector<8x8xf32>
    %57 = arith.subf %53, %56 : vector<8x8xf32>
    %58 = math.exp %57 : vector<8x8xf32>
    %cst_29 = arith.constant dense<0.000000e+00> : vector<8xf32>
    %59 = vector.multi_reduction <add>, %58, %cst_29 [1] : vector<8x8xf32> to vector<8xf32>
    %60 = vector.shape_cast %59 : vector<8xf32> to vector<8x1xf32>
    %61 = tpu.reciprocal %60 {approx = true} : vector<8x1xf32> -> vector<8x1xf32>
    %62 = vector.broadcast %61 : vector<8x1xf32> to vector<8x8xf32>
    %63 = arith.mulf %58, %62 : vector<8x8xf32>
    %64 = arith.truncf %63 : vector<8x8xf32> to vector<8x8xbf16>
    %cst_30 = arith.constant dense<0.000000e+00> : vector<8x8xf32>
    %65 = tpu.matmul %64, %48, %cst_30 {dimension_numbers = #tpu.dot_dimension_numbers<[1], [0], [0], [1], [0, 0, 1, 1], [], []>} : vector<8x8xbf16>, vector<8x8xbf16>, vector<8x8xf32> -> vector<8x8xf32>
    %66 = vector.extract_strided_slice %10 {offsets = [0, 16], sizes = [8, 8], strides = [1, 1]} : vector<8x32xf32> to vector<8x8xf32>
    %cst_31 = arith.constant 0.353553385 : f32
    %67 = vector.broadcast %cst_31 : f32 to vector<8x8xf32>
    %68 = arith.mulf %66, %67 : vector<8x8xf32>
    %69 = arith.truncf %68 : vector<8x8xf32> to vector<8x8xbf16>
    %70 = vector.extract_strided_slice %15 {offsets = [0, 16], sizes = [8, 8], strides = [1, 1]} : vector<8x64xf32> to vector<8x8xf32>
    %71 = arith.truncf %70 : vector<8x8xf32> to vector<8x8xbf16>
    %72 = vector.extract_strided_slice %15 {offsets = [0, 48], sizes = [8, 8], strides = [1, 1]} : vector<8x64xf32> to vector<8x8xf32>
    %73 = arith.truncf %72 : vector<8x8xf32> to vector<8x8xbf16>
    "tpu.trace_start"() <{level = 10 : i32, message = "qd,kd->qk"}> : () -> ()
    %cst_32 = arith.constant dense<0.000000e+00> : vector<8x8xf32>
    %74 = tpu.matmul %69, %71, %cst_32 {dimension_numbers = #tpu.dot_dimension_numbers<[1], [1], [0], [0], [0, 0, 1, 0], [], []>} : vector<8x8xbf16>, vector<8x8xbf16>, vector<8x8xf32> -> vector<8x8xf32>
    %cst_33 = arith.constant 0.000000e+00 : f32
    "tpu.trace_stop"() : () -> ()
    %75 = vector.broadcast %cst_33 : f32 to vector<8x8xf32>
    %76 = arith.cmpf ogt, %5, %75 : vector<8x8xf32>
    %cst_34 = arith.constant -1.000000e+09 : f32
    %77 = vector.broadcast %cst_34 : f32 to vector<8x8xf32>
    %78 = arith.select %76, %74, %77 : vector<8x8xi1>, vector<8x8xf32>
    %cst_35 = arith.constant dense<0xFF800000> : vector<8xf32>
    %79 = vector.multi_reduction <maximumf>, %78, %cst_35 [1] : vector<8x8xf32> to vector<8xf32>
    %80 = vector.shape_cast %79 : vector<8xf32> to vector<8x1xf32>
    %81 = vector.broadcast %80 : vector<8x1xf32> to vector<8x8xf32>
    %82 = arith.subf %78, %81 : vector<8x8xf32>
    %83 = math.exp %82 : vector<8x8xf32>
    %cst_36 = arith.constant dense<0.000000e+00> : vector<8xf32>
    %84 = vector.multi_reduction <add>, %83, %cst_36 [1] : vector<8x8xf32> to vector<8xf32>
    %85 = vector.shape_cast %84 : vector<8xf32> to vector<8x1xf32>
    %86 = tpu.reciprocal %85 {approx = true} : vector<8x1xf32> -> vector<8x1xf32>
    %87 = vector.broadcast %86 : vector<8x1xf32> to vector<8x8xf32>
    %88 = arith.mulf %83, %87 : vector<8x8xf32>
    %89 = arith.truncf %88 : vector<8x8xf32> to vector<8x8xbf16>
    %cst_37 = arith.constant dense<0.000000e+00> : vector<8x8xf32>
    %90 = tpu.matmul %89, %73, %cst_37 {dimension_numbers = #tpu.dot_dimension_numbers<[1], [0], [0], [1], [0, 0, 1, 1], [], []>} : vector<8x8xbf16>, vector<8x8xbf16>, vector<8x8xf32> -> vector<8x8xf32>
    %91 = vector.extract_strided_slice %10 {offsets = [0, 24], sizes = [8, 8], strides = [1, 1]} : vector<8x32xf32> to vector<8x8xf32>
    %cst_38 = arith.constant 0.353553385 : f32
    %92 = vector.broadcast %cst_38 : f32 to vector<8x8xf32>
    %93 = arith.mulf %91, %92 : vector<8x8xf32>
    %94 = arith.truncf %93 : vector<8x8xf32> to vector<8x8xbf16>
    %95 = vector.extract_strided_slice %15 {offsets = [0, 24], sizes = [8, 8], strides = [1, 1]} : vector<8x64xf32> to vector<8x8xf32>
    %96 = arith.truncf %95 : vector<8x8xf32> to vector<8x8xbf16>
    %97 = vector.extract_strided_slice %15 {offsets = [0, 56], sizes = [8, 8], strides = [1, 1]} : vector<8x64xf32> to vector<8x8xf32>
    %98 = arith.truncf %97 : vector<8x8xf32> to vector<8x8xbf16>
    "tpu.trace_start"() <{level = 10 : i32, message = "qd,kd->qk"}> : () -> ()
    %cst_39 = arith.constant dense<0.000000e+00> : vector<8x8xf32>
    %99 = tpu.matmul %94, %96, %cst_39 {dimension_numbers = #tpu.dot_dimension_numbers<[1], [1], [0], [0], [0, 0, 1, 0], [], []>} : vector<8x8xbf16>, vector<8x8xbf16>, vector<8x8xf32> -> vector<8x8xf32>
    %cst_40 = arith.constant 0.000000e+00 : f32
    "tpu.trace_stop"() : () -> ()
    %100 = vector.broadcast %cst_40 : f32 to vector<8x8xf32>
    %101 = arith.cmpf ogt, %5, %100 : vector<8x8xf32>
    %cst_41 = arith.constant -1.000000e+09 : f32
    %102 = vector.broadcast %cst_41 : f32 to vector<8x8xf32>
    %103 = arith.select %101, %99, %102 : vector<8x8xi1>, vector<8x8xf32>
    %cst_42 = arith.constant dense<0xFF800000> : vector<8xf32>
    %104 = vector.multi_reduction <maximumf>, %103, %cst_42 [1] : vector<8x8xf32> to vector<8xf32>
    %105 = vector.shape_cast %104 : vector<8xf32> to vector<8x1xf32>
    %106 = vector.broadcast %105 : vector<8x1xf32> to vector<8x8xf32>
    %107 = arith.subf %103, %106 : vector<8x8xf32>
    %108 = math.exp %107 : vector<8x8xf32>
    %cst_43 = arith.constant dense<0.000000e+00> : vector<8xf32>
    %109 = vector.multi_reduction <add>, %108, %cst_43 [1] : vector<8x8xf32> to vector<8xf32>
    %110 = vector.shape_cast %109 : vector<8xf32> to vector<8x1xf32>
    %111 = tpu.reciprocal %110 {approx = true} : vector<8x1xf32> -> vector<8x1xf32>
    %112 = vector.broadcast %111 : vector<8x1xf32> to vector<8x8xf32>
    %113 = arith.mulf %108, %112 : vector<8x8xf32>
    %114 = arith.truncf %113 : vector<8x8xf32> to vector<8x8xbf16>
    %cst_44 = arith.constant dense<0.000000e+00> : vector<8x8xf32>
    %115 = tpu.matmul %114, %98, %cst_44 {dimension_numbers = #tpu.dot_dimension_numbers<[1], [0], [0], [1], [0, 0, 1, 1], [], []>} : vector<8x8xbf16>, vector<8x8xbf16>, vector<8x8xf32> -> vector<8x8xf32>
    %116 = tpu.concatenate %40, %65, %90, %115 in 1 : vector<8x8xf32>, vector<8x8xf32>, vector<8x8xf32>, vector<8x8xf32> -> vector<8x32xf32>
    %117 = arith.truncf %116 : vector<8x32xf32> to vector<8x32xbf16>
    %c0_45 = arith.constant 0 : index
    %c0_46 = arith.constant 0 : index
    %c0_47 = arith.constant 0 : index
    %118 = vector.load %arg8[%c0_45, %c0_46, %c0_47] : memref<1x8x32xbf16, #tpu.memory_space<vmem>>, vector<1x8x32xbf16>
    %119 = vector.shape_cast %118 : vector<1x8x32xbf16> to vector<8x32xbf16>
    %120 = vector.shape_cast %117 : vector<8x32xbf16> to vector<1x8x32xbf16>
    tpu.vector_store %arg8[%c0_45, %c0_46, %c0_47], %120 {strides = array<i32>} : memref<1x8x32xbf16, #tpu.memory_space<vmem>>, vector<1x8x32xbf16>,
    return
  }
  func.func @transform_0(%arg0: i32) -> (i32, i32, i32) {
    %c0_i32 = arith.constant 0 : i32
    %c0_i32_0 = arith.constant 0 : i32
    %c0_i32_1 = arith.constant 0 : i32
    return %arg0, %c0_i32, %c0_i32_0 : i32, i32, i32
  }
  func.func @transform_1(%arg0: i32) -> (i32, i32, i32) {
    %c0_i32 = arith.constant 0 : i32
    %c0_i32_0 = arith.constant 0 : i32
    %c0_i32_1 = arith.constant 0 : i32
    return %arg0, %c0_i32, %c0_i32_0 : i32, i32, i32
  }
  func.func @transform_2(%arg0: i32) -> (i32, i32) {
    %c0_i32 = arith.constant 0 : i32
    %c0_i32_0 = arith.constant 0 : i32
    %c0_i32_1 = arith.constant 0 : i32
    return %c0_i32, %c0_i32_0 : i32, i32
  }
  func.func @transform_3(%arg0: i32) -> (i32, i32) {
    %c0_i32 = arith.constant 0 : i32
    %c0_i32_0 = arith.constant 0 : i32
    %c0_i32_1 = arith.constant 0 : i32
    return %c0_i32, %c0_i32_0 : i32, i32
  }
  func.func @transform_4(%arg0: i32) -> (i32, i32) {
    %c0_i32 = arith.constant 0 : i32
    %c0_i32_0 = arith.constant 0 : i32
    %c0_i32_1 = arith.constant 0 : i32
    return %c0_i32, %c0_i32_0 : i32, i32
  }
  func.func @transform_5(%arg0: i32) -> (i32, i32) {
    %c0_i32 = arith.constant 0 : i32
    %c0_i32_0 = arith.constant 0 : i32
    %c0_i32_1 = arith.constant 0 : i32
    return %c0_i32, %c0_i32_0 : i32, i32
  }
  func.func @transform_6(%arg0: i32) -> (i32, i32, i32) {
    %c0_i32 = arith.constant 0 : i32
    %c0_i32_0 = arith.constant 0 : i32
    %c0_i32_1 = arith.constant 0 : i32
    return %arg0, %c0_i32, %c0_i32_0 : i32, i32, i32
  }
  func.func @transform_7(%arg0: i32) -> (i32, i32, i32) {
    %c0_i32 = arith.constant 0 : i32
    %c0_i32_0 = arith.constant 0 : i32
    %c0_i32_1 = arith.constant 0 : i32
    return %arg0, %c0_i32, %c0_i32_0 : i32, i32, i32
  }
}

module attributes {stable_mosaic.version = 11 : i64} {
  func.func @_ffn_add_ln_kernel(%arg0: i32, %arg1: i32, %arg2: memref<16x32xbf16, #tpu.memory_space<vmem>>, %arg3: memref<32x64xbf16, #tpu.memory_space<vmem>>, %arg4: memref<1x64xf32, #tpu.memory_space<vmem>>, %arg5: memref<64x32xbf16, #tpu.memory_space<vmem>>, %arg6: memref<1x32xf32, #tpu.memory_space<vmem>>, %arg7: memref<1x32xf32, #tpu.memory_space<vmem>>, %arg8: memref<1x32xf32, #tpu.memory_space<vmem>>, %arg9: memref<16x32xbf16, #tpu.memory_space<vmem>>, %arg10: memref<16x32xf32, #tpu.memory_space<vmem>>) attributes {dimension_semantics = [#tpu.dimension_semantics<parallel>, #tpu.dimension_semantics<arbitrary>], iteration_bounds = array<i64: 1, 1>, scalar_prefetch = 0 : i64, scratch_operands = 1 : i64, tpu.core_type = #tpu.core_type<tc>, window_params = [{transform_indices = @transform_0, window_bounds = array<i64: 16, 32>}, {transform_indices = @transform_1, window_bounds = array<i64: 32, 64>}, {transform_indices = @transform_2, window_bounds = array<i64: 1, 64>}, {transform_indices = @transform_3, window_bounds = array<i64: 64, 32>}, {pipeline_mode = #tpu.pipeline_mode<synchronous>, transform_indices = @transform_4, window_bounds = array<i64: 1, 32>}, {pipeline_mode = #tpu.pipeline_mode<synchronous>, transform_indices = @transform_5, window_bounds = array<i64: 1, 32>}, {pipeline_mode = #tpu.pipeline_mode<synchronous>, transform_indices = @transform_6, window_bounds = array<i64: 1, 32>}, {transform_indices = @transform_7, window_bounds = array<i64: 16, 32>}]} {
    %c0_i32 = arith.constant 0 : i32
    %0 = arith.cmpi eq, %arg1, %c0_i32 : i32
    %1 = arith.extui %0 : i1 to i32
    %c0_i32_0 = arith.constant 0 : i32
    %2 = arith.cmpi ne, %1, %c0_i32_0 : i32
    scf.if %2 {
      %cst_16 = arith.constant 0.000000e+00 : f32
      %20 = vector.broadcast %cst_16 : f32 to vector<16x32xf32>
      %c0_17 = arith.constant 0 : index
      %c0_18 = arith.constant 0 : index
      %21 = vector.load %arg10[%c0_17, %c0_18] : memref<16x32xf32, #tpu.memory_space<vmem>>, vector<16x32xf32>
      tpu.vector_store %arg10[%c0_17, %c0_18], %20 {strides = array<i32>} : memref<16x32xf32, #tpu.memory_space<vmem>>, vector<16x32xf32>,
    } else {
    }
    %c0 = arith.constant 0 : index
    %c0_1 = arith.constant 0 : index
    %3 = vector.load %arg2[%c0, %c0_1] : memref<16x32xbf16, #tpu.memory_space<vmem>>, vector<16x32xbf16>
    %c0_2 = arith.constant 0 : index
    %c0_3 = arith.constant 0 : index
    %4 = vector.load %arg3[%c0_2, %c0_3] : memref<32x64xbf16, #tpu.memory_space<vmem>>, vector<32x64xbf16>
    %cst = arith.constant dense<0.000000e+00> : vector<16x64xf32>
    %5 = tpu.matmul %3, %4, %cst {dimension_numbers = #tpu.dot_dimension_numbers<[1], [0], [0], [1], [0, 0, 1, 1], [], []>} : vector<16x32xbf16>, vector<32x64xbf16>, vector<16x64xf32> -> vector<16x64xf32>
    %c0_4 = arith.constant 0 : index
    %c0_5 = arith.constant 0 : index
    %6 = vector.load %arg4[%c0_4, %c0_5] : memref<1x64xf32, #tpu.memory_space<vmem>>, vector<1x64xf32>
    %7 = vector.broadcast %6 : vector<1x64xf32> to vector<16x64xf32>
    %8 = arith.addf %5, %7 : vector<16x64xf32>
    %cst_6 = arith.constant 0.000000e+00 : f32
    %9 = vector.broadcast %cst_6 : f32 to vector<16x64xf32>
    %10 = arith.maximumf %8, %9 : vector<16x64xf32>
    %11 = arith.truncf %10 : vector<16x64xf32> to vector<16x64xbf16>
    %c0_7 = arith.constant 0 : index
    %c0_8 = arith.constant 0 : index
    %12 = vector.load %arg10[%c0_7, %c0_8] : memref<16x32xf32, #tpu.memory_space<vmem>>, vector<16x32xf32>
    %c0_9 = arith.constant 0 : index
    %c0_10 = arith.constant 0 : index
    %13 = vector.load %arg5[%c0_9, %c0_10] : memref<64x32xbf16, #tpu.memory_space<vmem>>, vector<64x32xbf16>
    %cst_11 = arith.constant dense<0.000000e+00> : vector<16x32xf32>
    %14 = tpu.matmul %11, %13, %cst_11 {dimension_numbers = #tpu.dot_dimension_numbers<[1], [0], [0], [1], [0, 0, 1, 1], [], []>} : vector<16x64xbf16>, vector<64x32xbf16>, vector<16x32xf32> -> vector<16x32xf32>
    %15 = arith.addf %12, %14 : vector<16x32xf32>
    %c0_12 = arith.constant 0 : index
    %c0_13 = arith.constant 0 : index
    %16 = vector.load %arg10[%c0_12, %c0_13] : memref<16x32xf32, #tpu.memory_space<vmem>>, vector<16x32xf32>
    tpu.vector_store %arg10[%c0_12, %c0_13], %15 {strides = array<i32>} : memref<16x32xf32, #tpu.memory_space<vmem>>, vector<16x32xf32>,
    %c0_i32_14 = arith.constant 0 : i32
    %17 = arith.cmpi eq, %arg1, %c0_i32_14 : i32
    %18 = arith.extui %17 : i1 to i32
    %c0_i32_15 = arith.constant 0 : i32
    %19 = arith.cmpi ne, %18, %c0_i32_15 : i32
    scf.if %19 {
      %c0_16 = arith.constant 0 : index
      %c0_17 = arith.constant 0 : index
      %20 = vector.load %arg10[%c0_16, %c0_17] : memref<16x32xf32, #tpu.memory_space<vmem>>, vector<16x32xf32>
      %c0_18 = arith.constant 0 : index
      %c0_19 = arith.constant 0 : index
      %21 = vector.load %arg6[%c0_18, %c0_19] : memref<1x32xf32, #tpu.memory_space<vmem>>, vector<1x32xf32>
      %22 = vector.broadcast %21 : vector<1x32xf32> to vector<16x32xf32>
      %23 = arith.addf %20, %22 : vector<16x32xf32>
      %24 = arith.extf %3 : vector<16x32xbf16> to vector<16x32xf32>
      %25 = arith.addf %23, %24 : vector<16x32xf32>
      %cst_20 = arith.constant dense<0.000000e+00> : vector<16xf32>
      %26 = vector.multi_reduction <add>, %25, %cst_20 [1] : vector<16x32xf32> to vector<16xf32>
      %27 = vector.shape_cast %26 : vector<16xf32> to vector<16x1xf32>
      %cst_21 = arith.constant 3.200000e+01 : f32
      %28 = vector.broadcast %cst_21 : f32 to vector<16x1xf32>
      %29 = arith.divf %27, %28 : vector<16x1xf32>
      %30 = vector.broadcast %29 : vector<16x1xf32> to vector<16x32xf32>
      %31 = arith.subf %25, %30 : vector<16x32xf32>
      %32 = arith.mulf %31, %31 : vector<16x32xf32>
      %cst_22 = arith.constant dense<0.000000e+00> : vector<16xf32>
      %33 = vector.multi_reduction <add>, %32, %cst_22 [1] : vector<16x32xf32> to vector<16xf32>
      %34 = vector.shape_cast %33 : vector<16xf32> to vector<16x1xf32>
      %cst_23 = arith.constant 3.200000e+01 : f32
      %35 = vector.broadcast %cst_23 : f32 to vector<16x1xf32>
      %36 = arith.divf %34, %35 : vector<16x1xf32>
      %37 = vector.broadcast %29 : vector<16x1xf32> to vector<16x32xf32>
      %38 = arith.subf %25, %37 : vector<16x32xf32>
      %cst_24 = arith.constant 9.99999974E-6 : f32
      %39 = vector.broadcast %cst_24 : f32 to vector<16x1xf32>
      %40 = arith.addf %36, %39 : vector<16x1xf32>
      %41 = math.rsqrt %40 : vector<16x1xf32>
      %42 = vector.broadcast %41 : vector<16x1xf32> to vector<16x32xf32>
      %43 = arith.mulf %38, %42 : vector<16x32xf32>
      %c0_25 = arith.constant 0 : index
      %c0_26 = arith.constant 0 : index
      %44 = vector.load %arg7[%c0_25, %c0_26] : memref<1x32xf32, #tpu.memory_space<vmem>>, vector<1x32xf32>
      %45 = vector.broadcast %44 : vector<1x32xf32> to vector<16x32xf32>
      %46 = arith.mulf %43, %45 : vector<16x32xf32>
      %c0_27 = arith.constant 0 : index
      %c0_28 = arith.constant 0 : index
      %47 = vector.load %arg8[%c0_27, %c0_28] : memref<1x32xf32, #tpu.memory_space<vmem>>, vector<1x32xf32>
      %48 = vector.broadcast %47 : vector<1x32xf32> to vector<16x32xf32>
      %49 = arith.addf %46, %48 : vector<16x32xf32>
      %50 = arith.truncf %49 : vector<16x32xf32> to vector<16x32xbf16>
      %c0_29 = arith.constant 0 : index
      %c0_30 = arith.constant 0 : index
      %51 = vector.load %arg9[%c0_29, %c0_30] : memref<16x32xbf16, #tpu.memory_space<vmem>>, vector<16x32xbf16>
      tpu.vector_store %arg9[%c0_29, %c0_30], %50 {strides = array<i32>} : memref<16x32xbf16, #tpu.memory_space<vmem>>, vector<16x32xbf16>,
    } else {
    }
    return
  }
  func.func @transform_0(%arg0: i32, %arg1: i32) -> (i32, i32) {
    %c0_i32 = arith.constant 0 : i32
    %c0_i32_0 = arith.constant 0 : i32
    return %arg0, %c0_i32 : i32, i32
  }
  func.func @transform_1(%arg0: i32, %arg1: i32) -> (i32, i32) {
    %c0_i32 = arith.constant 0 : i32
    %c0_i32_0 = arith.constant 0 : i32
    return %c0_i32, %arg1 : i32, i32
  }
  func.func @transform_2(%arg0: i32, %arg1: i32) -> (i32, i32) {
    %c0_i32 = arith.constant 0 : i32
    %c0_i32_0 = arith.constant 0 : i32
    return %c0_i32, %arg1 : i32, i32
  }
  func.func @transform_3(%arg0: i32, %arg1: i32) -> (i32, i32) {
    %c0_i32 = arith.constant 0 : i32
    %c0_i32_0 = arith.constant 0 : i32
    return %arg1, %c0_i32 : i32, i32
  }
  func.func @transform_4(%arg0: i32, %arg1: i32) -> (i32, i32) {
    %c0_i32 = arith.constant 0 : i32
    %c0_i32_0 = arith.constant 0 : i32
    %c0_i32_1 = arith.constant 0 : i32
    return %c0_i32, %c0_i32_0 : i32, i32
  }
  func.func @transform_5(%arg0: i32, %arg1: i32) -> (i32, i32) {
    %c0_i32 = arith.constant 0 : i32
    %c0_i32_0 = arith.constant 0 : i32
    %c0_i32_1 = arith.constant 0 : i32
    return %c0_i32, %c0_i32_0 : i32, i32
  }
  func.func @transform_6(%arg0: i32, %arg1: i32) -> (i32, i32) {
    %c0_i32 = arith.constant 0 : i32
    %c0_i32_0 = arith.constant 0 : i32
    %c0_i32_1 = arith.constant 0 : i32
    return %c0_i32, %c0_i32_0 : i32, i32
  }
  func.func @transform_7(%arg0: i32, %arg1: i32) -> (i32, i32) {
    %c0_i32 = arith.constant 0 : i32
    %c0_i32_0 = arith.constant 0 : i32
    return %arg0, %c0_i32 : i32, i32
  }
}

module attributes {stable_mosaic.version = 11 : i64} {
  func.func @_ln_kernel(%arg0: i32, %arg1: memref<16x32xbf16, #tpu.memory_space<vmem>>, %arg2: memref<1x32xf32, #tpu.memory_space<vmem>>, %arg3: memref<1x32xf32, #tpu.memory_space<vmem>>, %arg4: memref<16x32xf32, #tpu.memory_space<vmem>>) attributes {dimension_semantics = [#tpu.dimension_semantics<parallel>], iteration_bounds = array<i64: 1>, scalar_prefetch = 0 : i64, scratch_operands = 0 : i64, tpu.core_type = #tpu.core_type<tc>, window_params = [{transform_indices = @transform_0, window_bounds = array<i64: 16, 32>}, {pipeline_mode = #tpu.pipeline_mode<synchronous>, transform_indices = @transform_1, window_bounds = array<i64: 1, 32>}, {pipeline_mode = #tpu.pipeline_mode<synchronous>, transform_indices = @transform_2, window_bounds = array<i64: 1, 32>}, {transform_indices = @transform_3, window_bounds = array<i64: 16, 32>}]} {
    %c0 = arith.constant 0 : index
    %c0_0 = arith.constant 0 : index
    %0 = vector.load %arg1[%c0, %c0_0] : memref<16x32xbf16, #tpu.memory_space<vmem>>, vector<16x32xbf16>
    %1 = arith.extf %0 : vector<16x32xbf16> to vector<16x32xf32>
    %cst = arith.constant dense<0.000000e+00> : vector<16xf32>
    %2 = vector.multi_reduction <add>, %1, %cst [1] : vector<16x32xf32> to vector<16xf32>
    %3 = vector.shape_cast %2 : vector<16xf32> to vector<16x1xf32>
    %cst_1 = arith.constant 3.200000e+01 : f32
    %4 = vector.broadcast %cst_1 : f32 to vector<16x1xf32>
    %5 = arith.divf %3, %4 : vector<16x1xf32>
    %6 = vector.broadcast %5 : vector<16x1xf32> to vector<16x32xf32>
    %7 = arith.subf %1, %6 : vector<16x32xf32>
    %8 = arith.mulf %7, %7 : vector<16x32xf32>
    %cst_2 = arith.constant dense<0.000000e+00> : vector<16xf32>
    %9 = vector.multi_reduction <add>, %8, %cst_2 [1] : vector<16x32xf32> to vector<16xf32>
    %10 = vector.shape_cast %9 : vector<16xf32> to vector<16x1xf32>
    %cst_3 = arith.constant 3.200000e+01 : f32
    %11 = vector.broadcast %cst_3 : f32 to vector<16x1xf32>
    %12 = arith.divf %10, %11 : vector<16x1xf32>
    %13 = vector.broadcast %5 : vector<16x1xf32> to vector<16x32xf32>
    %14 = arith.subf %1, %13 : vector<16x32xf32>
    %cst_4 = arith.constant 9.99999974E-6 : f32
    %15 = vector.broadcast %cst_4 : f32 to vector<16x1xf32>
    %16 = arith.addf %12, %15 : vector<16x1xf32>
    %17 = math.rsqrt %16 : vector<16x1xf32>
    %18 = vector.broadcast %17 : vector<16x1xf32> to vector<16x32xf32>
    %19 = arith.mulf %14, %18 : vector<16x32xf32>
    %c0_5 = arith.constant 0 : index
    %c0_6 = arith.constant 0 : index
    %20 = vector.load %arg2[%c0_5, %c0_6] : memref<1x32xf32, #tpu.memory_space<vmem>>, vector<1x32xf32>
    %21 = vector.broadcast %20 : vector<1x32xf32> to vector<16x32xf32>
    %22 = arith.mulf %19, %21 : vector<16x32xf32>
    %c0_7 = arith.constant 0 : index
    %c0_8 = arith.constant 0 : index
    %23 = vector.load %arg3[%c0_7, %c0_8] : memref<1x32xf32, #tpu.memory_space<vmem>>, vector<1x32xf32>
    %24 = vector.broadcast %23 : vector<1x32xf32> to vector<16x32xf32>
    %25 = arith.addf %22, %24 : vector<16x32xf32>
    %c0_9 = arith.constant 0 : index
    %c0_10 = arith.constant 0 : index
    %26 = vector.load %arg4[%c0_9, %c0_10] : memref<16x32xf32, #tpu.memory_space<vmem>>, vector<16x32xf32>
    tpu.vector_store %arg4[%c0_9, %c0_10], %25 {strides = array<i32>} : memref<16x32xf32, #tpu.memory_space<vmem>>, vector<16x32xf32>,
    return
  }
  func.func @transform_0(%arg0: i32) -> (i32, i32) {
    %c0_i32 = arith.constant 0 : i32
    %c0_i32_0 = arith.constant 0 : i32
    return %arg0, %c0_i32 : i32, i32
  }
  func.func @transform_1(%arg0: i32) -> (i32, i32) {
    %c0_i32 = arith.constant 0 : i32
    %c0_i32_0 = arith.constant 0 : i32
    %c0_i32_1 = arith.constant 0 : i32
    return %c0_i32, %c0_i32_0 : i32, i32
  }
  func.func @transform_2(%arg0: i32) -> (i32, i32) {
    %c0_i32 = arith.constant 0 : i32
    %c0_i32_0 = arith.constant 0 : i32
    %c0_i32_1 = arith.constant 0 : i32
    return %c0_i32, %c0_i32_0 : i32, i32
  }
  func.func @transform_3(%arg0: i32) -> (i32, i32) {
    %c0_i32 = arith.constant 0 : i32
    %c0_i32_0 = arith.constant 0 : i32
    return %arg0, %c0_i32 : i32, i32
  }
}

</mosaic_0001>

<llo_original>
// kernel: decoder_forward.12
$region0: #{decoder_forward.12}
  #allocation0 [shape = 'u32[]', space=smem, size = 0x4, offset = 0x4, fixed_abs, tag = 'smem constant byte address 0x4 - core index']
  #allocation1 [shape = 'u32[144,128]{1,0:T(1,128)}', space=vmem, size = 0x12000, scoped, tag = 'internal scratch']
  %s0 = inlined_call_operand.vmem [shape: bf16[16,32], index: 0, kind: input, shape index: {}]
  %s1 = inlined_call_operand.vmem [shape: bf16[32,32], index: 1, kind: input, shape index: {}]
  %s2 = inlined_call_operand.vmem [shape: f32[1,32], index: 2, kind: input, shape index: {}]
  %s3 = inlined_call_operand.vmem [shape: bf16[16,32], index: 3, kind: input, shape index: {}]
  %s4 = inlined_call_operand.vmem [shape: f32[1,32], index: 4, kind: input, shape index: {}]
  %s5 = inlined_call_operand.vmem [shape: f32[1,32], index: 5, kind: input, shape index: {}]
  %s6 = inlined_call_operand.vmem [shape: bf16[16,32], index: 6, kind: output, shape index: {}]
  %s7 = sld [smem:[#allocation0]]
  $region34: #{decoder_forward.12} parent=0
    _
  %s9 = ssub.s32 1, %s7
  %s10 = scalar_select 0, %s9, %s7
  // Predicated region
  $region2: #{decoder_forward.12} parent=0 // pred_check
    _
  $region3: #{decoder_forward.12} parent=0 // pred_check_branch
    %12 = sbr.rel (0) target = $region5
  $region4: #{decoder_forward.12} parent=0 // pred_region
    _
  $region5: #{decoder_forward.12} parent=0 // pred_fallthru
    _
  // Predicated region
  $region6: #{decoder_forward.12} parent=0 // pred_check
    _
  $region7: #{decoder_forward.12} parent=0 // pred_check_branch
    %14 = sbr.rel (0) target = $region9
  $region8: #{decoder_forward.12} parent=0 // pred_region
    _
  $region9: #{decoder_forward.12} parent=0 // pred_fallthru
    _
  // Predicated region
  $region10: #{decoder_forward.12} parent=0 // pred_check
    _
  $region11: #{decoder_forward.12} parent=0 // pred_check_branch
    %16 = sbr.rel (0) target = $region13
  $region12: #{decoder_forward.12} parent=0 // pred_region
    _
  $region13: #{decoder_forward.12} parent=0 // pred_fallthru
    _
  // Predicated region
  $region14: #{decoder_forward.12} parent=0 // pred_check
    _
  $region15: #{decoder_forward.12} parent=0 // pred_check_branch
    %18 = sbr.rel (0) target = $region17
  $region16: #{decoder_forward.12} parent=0 // pred_region
    _
  $region17: #{decoder_forward.12} parent=0 // pred_fallthru
    _
  // Predicated region
  $region18: #{decoder_forward.12} parent=0 // pred_check
    _
  $region19: #{decoder_forward.12} parent=0 // pred_check_branch
    %20 = sbr.rel (0) target = $region21
  $region20: #{decoder_forward.12} parent=0 // pred_region
    _
  $region21: #{decoder_forward.12} parent=0 // pred_fallthru
    _
  // Predicated region
  $region22: #{decoder_forward.12} parent=0 // pred_check
    _
  $region23: #{decoder_forward.12} parent=0 // pred_check_branch
    %22 = sbr.rel (0) target = $region25
  $region24: #{decoder_forward.12} parent=0 // pred_region
    _
  $region25: #{decoder_forward.12} parent=0 // pred_fallthru
    _
  %v24 = vld [vmem:[%s0] sm:$0xf]
  %v25 = vld [vmem:[%s0 + $0x4] sm:$0xf]
  %v26 = vld [vmem:[%s1] sm:$0xf]
  %v27 = vld [vmem:[%s1 + $0x4] sm:$0xf]
  %v28 = vld [vmem:[%s1 + $0x8] sm:$0xf]
  %v29 = vld [vmem:[%s1 + $0xc] sm:$0xf]
  %v30 = vld [vmem:[%s2] sm:$0x1]
  %v32 = vlaneseq
  %v33 = vshrl.u32 %v32, 7
  %v34 = vsub.s32 0, %v33
  %v35 = vrot.slane %v30, %v34
  %v39 = vunpack.c.l.b16 %v24
  %v40 = vunpack.c.l.b16 %v25
  %v41 = vpack.c.b16 %v40, %v39
  %v46 = vunpack.c.l.b16 %v26
  %v47 = vunpack.c.l.b16 %v27
  %v48 = vunpack.c.l.b16 %v28
  %v49 = vunpack.c.l.b16 %v29
  %v50 = vpack.c.b16 %v47, %v46
  %v51 = vpack.c.b16 %v49, %v48
  %vm54 = vcmask 261120
  %v56 = vsel %vm54, %v41, 0
  %58 = vmatprep.subr.bf16.mxu0 0
  %59 = vmatpush1.bf16.msra.mxu0 %v50
  %60 = vmatprep.subr.bf16.mxu0 0
  %61 = vmatpush1.bf16.msra.mxu0 %v51
  %62 = vmatprep.subr.bf16.mxu0 0
  %63 = vmatpush1.bf16.msra.mxu0 0
  %64 = vmatprep.subr.bf16.mxu0 0
  %65 = vmatpush1.bf16.msra.mxu0 0
  %66 = vmatprep.subr.bf16.mxu0 0
  %67 = vmatpush1.bf16.msra.mxu0 0
  %68 = vmatprep.subr.bf16.mxu0 0
  %69 = vmatpush1.bf16.msra.mxu0 0
  %70 = vmatprep.subr.bf16.mxu0 0
  %71 = vmatpush1.bf16.msra.mxu0 0
  %72 = vmatprep.subr.bf16.mxu0 0
  %73 = vmatpush1.bf16.msra.mxu0 0
  %74 = vmatprep.subr.bf16.mxu0 0
  %75 = vmatpush1.bf16.msra.mxu0 0
  %76 = vmatprep.subr.bf16.mxu0 0
  %77 = vmatpush1.bf16.msra.mxu0 0
  %78 = vmatprep.subr.bf16.mxu0 0
  %79 = vmatpush1.bf16.msra.mxu0 0
  %80 = vmatprep.subr.bf16.mxu0 0
  %81 = vmatpush1.bf16.msra.mxu0 0
  %82 = vmatprep.subr.bf16.mxu0 0
  %83 = vmatpush1.bf16.msra.mxu0 0
  %84 = vmatprep.subr.bf16.mxu0 0
  %85 = vmatpush1.bf16.msra.mxu0 0
  %86 = vmatprep.subr.bf16.mxu0 0
  %87 = vmatpush1.bf16.msra.mxu0 0
  %88 = vmatprep.subr.bf16.mxu0 0
  %89 = vmatpush1.bf16.msra.mxu0 0
  %90 = vmatprep.mubr.bf16.mxu0 0
  %91 = vmatmul.mubr.bf16.gmra.mrb[0].mxu0 %v56
  %v92 = vpop.f32.mrb[0].mxu0
  %v93 = vadd.f32 %v35, %v92
  %v94 = vpop.f32.mrb[0].mxu0
  %v95 = vpop.f32.mrb[0].mxu0
  %v96 = vadd.f32 %v35, %v95
  %v97 = vpop.f32.mrb[0].mxu0
  %98 = vdwg.mxu0
  %v99 = vld [vmem:[%s3] sm:$0xf]
  %v100 = vld [vmem:[%s3 + $0x4] sm:$0xf]
  %v101 = vunpack.c.l.bf16 %v99
  %v102 = vunpack.c.l.bf16 %v100
  %v103 = vadd.f32 %v93, %v101
  %v104 = vadd.f32 %v96, %v102
  %v105 = vsel %vm54, %v103, 0.0
  %106 = vadd.xlane.f32.xlu0 %v105
  %v107 = vpop.xlane.xlu0 %106
  %v108 = vsel %vm54, %v104, 0.0
  %109 = vadd.xlane.f32.xlu0 %v108
  %v110 = vpop.xlane.xlu0 %109
  %v111 = vrcp.pop 32.0
  %v112 = vmul.f32 %v107, %v111
  %v113 = vmul.f32 %v110, %v111
  %v114 = vsub.f32 %v103, %v112
  %v115 = vsub.f32 %v104, %v113
  %v116 = vmul.f32 %v114, %v114
  %v117 = vmul.f32 %v115, %v115
  %v118 = vsel %vm54, %v116, 0.0
  %119 = vadd.xlane.f32.xlu0 %v118
  %v120 = vpop.xlane.xlu0 %119
  %v121 = vsel %vm54, %v117, 0.0
  %122 = vadd.xlane.f32.xlu0 %v121
  %v123 = vpop.xlane.xlu0 %122
  %v124 = vmul.f32 %v120, %v111
  %v125 = vmul.f32 %v123, %v111
  %v126 = vadd.f32 %v124, 1e-05
  %v127 = vadd.f32 %v125, 1e-05
  %v128 = vrsqrt.pop %v126
  %v129 = vrsqrt.pop %v127
  %v130 = vmul.f32 %v114, %v128
  %v131 = vmul.f32 %v115, %v129
  %v132 = vld [vmem:[%s4] sm:$0x1]
  %v134 = vlaneseq
  %v135 = vshrl.u32 %v134, 7
  %v136 = vsub.s32 0, %v135
  %v137 = vrot.slane %v132, %v136
  %v139 = vmul.f32 %v130, %v137
  %v140 = vmul.f32 %v131, %v137
  %v141 = vld [vmem:[%s5] sm:$0x1]
  %v143 = vlaneseq
  %v144 = vshrl.u32 %v143, 7
  %v145 = vsub.s32 0, %v144
  %v146 = vrot.slane %v141, %v145
  %v148 = vadd.f32 %v139, %v146
  %v149 = vadd.f32 %v140, %v146
  %v150 = vpack.c.bf16 %v149, %v148
  %v152 = vunpack.c.l.b16 %v150
  %v153 = vunpack.c.h.b16 %v150
  %v154 = vpack.c.b16 %v152, %v152
  %v155 = vpack.c.b16 %v153, %v153
  %vm158 = vcmask 257024
  %159 = vst.msk [vmem:[%s6] sm:$0xf] %vm158, %v154
  %160 = vst.msk [vmem:[%s6 + $0x4] sm:$0xf] %vm158, %v155
  // Predicated region
  $region26: #{decoder_forward.12} parent=0 // pred_check
    _
  $region27: #{decoder_forward.12} parent=0 // pred_check_branch
    %162 = sbr.rel (0) target = $region29
  $region28: #{decoder_forward.12} parent=0 // pred_region
    _
  $region29: #{decoder_forward.12} parent=0 // pred_fallthru
    _
  // Predicated region
  $region30: #{decoder_forward.12} parent=0 // pred_check
    _
  $region31: #{decoder_forward.12} parent=0 // pred_check_branch
    %164 = sbr.rel (0) target = $region33
  $region32: #{decoder_forward.12} parent=0 // pred_region
    _
  $region33: #{decoder_forward.12} parent=0 // pred_fallthru
    _

// kernel: decoder_forward.15
$region0: #{decoder_forward.15}
  #allocation0 [shape = 'u32[]', space=smem, size = 0x4, offset = 0x4, fixed_abs, tag = 'smem constant byte address 0x4 - core index']
  #allocation1 [shape = 'u32[144,128]{1,0:T(1,128)}', space=vmem, size = 0x12000, scoped, tag = 'internal scratch']
  #allocation2 [shape = 'f32[16,32]{1,0:T(8,128)}', space=vmem, size = 0x2000, scoped, tag = 'scratch operand']
  %s0 = inlined_call_operand.vmem [shape: bf16[16,32], index: 0, kind: input, shape index: {}]
  %s1 = inlined_call_operand.vmem [shape: bf16[32,64], index: 1, kind: input, shape index: {}]
  %s2 = inlined_call_operand.vmem [shape: f32[1,64], index: 2, kind: input, shape index: {}]
  %s3 = inlined_call_operand.vmem [shape: bf16[64,32], index: 3, kind: input, shape index: {}]
  %s4 = inlined_call_operand.vmem [shape: f32[1,32], index: 4, kind: input, shape index: {}]
  %s5 = inlined_call_operand.vmem [shape: f32[1,32], index: 5, kind: input, shape index: {}]
  %s6 = inlined_call_operand.vmem [shape: f32[1,32], index: 6, kind: input, shape index: {}]
  %s7 = inlined_call_operand.vmem [shape: bf16[16,32], index: 7, kind: output, shape index: {}]
  %s8 = sld [smem:[#allocation0]]
  $region46: #{decoder_forward.15} parent=0
    _
  %s10 = ssub.s32 1, %s8
  %s11 = scalar_select 0, %s10, %s8
  // Predicated region
  $region2: #{decoder_forward.15} parent=0 // pred_check
    _
  $region3: #{decoder_forward.15} parent=0 // pred_check_branch
    %13 = sbr.rel (0) target = $region5
  $region4: #{decoder_forward.15} parent=0 // pred_region
    _
  $region5: #{decoder_forward.15} parent=0 // pred_fallthru
    _
  // Predicated region
  $region6: #{decoder_forward.15} parent=0 // pred_check
    _
  $region7: #{decoder_forward.15} parent=0 // pred_check_branch
    %15 = sbr.rel (0) target = $region9
  $region8: #{decoder_forward.15} parent=0 // pred_region
    _
  $region9: #{decoder_forward.15} parent=0 // pred_fallthru
    _
  // Predicated region
  $region10: #{decoder_forward.15} parent=0 // pred_check
    _
  $region11: #{decoder_forward.15} parent=0 // pred_check_branch
    %17 = sbr.rel (0) target = $region13
  $region12: #{decoder_forward.15} parent=0 // pred_region
    _
  $region13: #{decoder_forward.15} parent=0 // pred_fallthru
    _
  // Predicated region
  $region14: #{decoder_forward.15} parent=0 // pred_check
    _
  $region15: #{decoder_forward.15} parent=0 // pred_check_branch
    %19 = sbr.rel (0) target = $region17
  $region16: #{decoder_forward.15} parent=0 // pred_region
    _
  $region17: #{decoder_forward.15} parent=0 // pred_fallthru
    _
  // Predicated region
  $region18: #{decoder_forward.15} parent=0 // pred_check
    _
  $region19: #{decoder_forward.15} parent=0 // pred_check_branch
    %21 = sbr.rel (0) target = $region21
  $region20: #{decoder_forward.15} parent=0 // pred_region
    _
  $region21: #{decoder_forward.15} parent=0 // pred_fallthru
    _
  // Predicated region
  $region22: #{decoder_forward.15} parent=0 // pred_check
    _
  $region23: #{decoder_forward.15} parent=0 // pred_check_branch
    %23 = sbr.rel (0) target = $region25
  $region24: #{decoder_forward.15} parent=0 // pred_region
    _
  $region25: #{decoder_forward.15} parent=0 // pred_fallthru
    _
  // Predicated region
  $region26: #{decoder_forward.15} parent=0 // pred_check
    _
  $region27: #{decoder_forward.15} parent=0 // pred_check_branch
    %25 = sbr.rel (0) target = $region29
  $region28: #{decoder_forward.15} parent=0 // pred_region
    _
  $region29: #{decoder_forward.15} parent=0 // pred_fallthru
    _
  %p27 = scmp.eq.s32.totalorder 0, 0
  // Predicated region
  $region30: #{decoder_forward.15} parent=0 // pred_check
    %p28 = pneg %p27
  $region31: #{decoder_forward.15} parent=0 // pred_check_branch
    %30 = sbr.rel (%p28) target = $region33
  $region32: #{decoder_forward.15} parent=0 // pred_region
    %vm31 = vcmask 261120
    %32 = vst.msk [vmem:[#allocation2] sm:$0xff] %vm31, 0.0
    %33 = vst.msk [vmem:[#allocation2 + $0x8] sm:$0xff] %vm31, 0.0
  $region33: #{decoder_forward.15} parent=0 // pred_fallthru
    _
  %v34 = vld [vmem:[%s0] sm:$0xf]
  %v35 = vld [vmem:[%s0 + $0x4] sm:$0xf]
  %v36 = vld [vmem:[%s1] sm:$0xf]
  %v37 = vld [vmem:[%s1 + $0x4] sm:$0xf]
  %v38 = vld [vmem:[%s1 + $0x8] sm:$0xf]
  %v39 = vld [vmem:[%s1 + $0xc] sm:$0xf]
  %v40 = vld [vmem:[%s2] sm:$0x1]
  %v42 = vlaneseq
  %v43 = vshrl.u32 %v42, 7
  %v44 = vsub.s32 0, %v43
  %v45 = vrot.slane %v40, %v44
  %v49 = vunpack.c.l.b16 %v34
  %v50 = vunpack.c.l.b16 %v35
  %v51 = vpack.c.b16 %v50, %v49
  %v56 = vunpack.c.l.b16 %v36
  %v57 = vunpack.c.l.b16 %v37
  %v58 = vunpack.c.l.b16 %v38
  %v59 = vunpack.c.l.b16 %v39
  %v60 = vpack.c.b16 %v57, %v56
  %v61 = vpack.c.b16 %v59, %v58
  %vm64 = vcmask 261120
  %v66 = vsel %vm64, %v51, 0
  %68 = vmatprep.subr.bf16.mxu0 0
  %69 = vmatpush1.bf16.msra.mxu0 %v60
  %70 = vmatprep.subr.bf16.mxu0 0
  %71 = vmatpush1.bf16.msra.mxu0 %v61
  %72 = vmatprep.subr.bf16.mxu0 0
  %73 = vmatpush1.bf16.msra.mxu0 0
  %74 = vmatprep.subr.bf16.mxu0 0
  %75 = vmatpush1.bf16.msra.mxu0 0
  %76 = vmatprep.subr.bf16.mxu0 0
  %77 = vmatpush1.bf16.msra.mxu0 0
  %78 = vmatprep.subr.bf16.mxu0 0
  %79 = vmatpush1.bf16.msra.mxu0 0
  %80 = vmatprep.subr.bf16.mxu0 0
  %81 = vmatpush1.bf16.msra.mxu0 0
  %82 = vmatprep.subr.bf16.mxu0 0
  %83 = vmatpush1.bf16.msra.mxu0 0
  %84 = vmatprep.subr.bf16.mxu0 0
  %85 = vmatpush1.bf16.msra.mxu0 0
  %86 = vmatprep.subr.bf16.mxu0 0
  %87 = vmatpush1.bf16.msra.mxu0 0
  %88 = vmatprep.subr.bf16.mxu0 0
  %89 = vmatpush1.bf16.msra.mxu0 0
  %90 = vmatprep.subr.bf16.mxu0 0
  %91 = vmatpush1.bf16.msra.mxu0 0
  %92 = vmatprep.subr.bf16.mxu0 0
  %93 = vmatpush1.bf16.msra.mxu0 0
  %94 = vmatprep.subr.bf16.mxu0 0
  %95 = vmatpush1.bf16.msra.mxu0 0
  %96 = vmatprep.subr.bf16.mxu0 0
  %97 = vmatpush1.bf16.msra.mxu0 0
  %98 = vmatprep.subr.bf16.mxu0 0
  %99 = vmatpush1.bf16.msra.mxu0 0
  %100 = vmatprep.mubr.bf16.mxu0 0
  %101 = vmatmul.mubr.bf16.gmra.mrb[0].mxu0 %v66
  %v102 = vpop.f32.mrb[0].mxu0
  %v103 = vadd.f32 %v45, %v102
  %v104 = vpop.f32.mrb[0].mxu0
  %v105 = vpop.f32.mrb[0].mxu0
  %v106 = vadd.f32 %v45, %v105
  %v107 = vpop.f32.mrb[0].mxu0
  %108 = vdwg.mxu0
  %v109 = vmax.f32 %v103, 0.0
  %v110 = vmax.f32 %v106, 0.0
  %v111 = vpack.c.bf16 %v110, %v109
  %v112 = vld [vmem:[#allocation2] sm:$0xff]
  %v113 = vld [vmem:[#allocation2 + $0x8] sm:$0xff]
  %v114 = vld [vmem:[%s3] sm:$0xf]
  %v115 = vld [vmem:[%s3 + $0x4] sm:$0xf]
  %v116 = vld [vmem:[%s3 + $0x8] sm:$0xf]
  %v117 = vld [vmem:[%s3 + $0xc] sm:$0xf]
  %v118 = vld [vmem:[%s3 + $0x10] sm:$0xf]
  %v119 = vld [vmem:[%s3 + $0x14] sm:$0xf]
  %v120 = vld [vmem:[%s3 + $0x18] sm:$0xf]
  %v121 = vld [vmem:[%s3 + $0x1c] sm:$0xf]
  %v130 = vunpack.c.l.b16 %v114
  %v131 = vunpack.c.l.b16 %v115
  %v132 = vunpack.c.l.b16 %v116
  %v133 = vunpack.c.l.b16 %v117
  %v134 = vunpack.c.l.b16 %v118
  %v135 = vunpack.c.l.b16 %v119
  %v136 = vunpack.c.l.b16 %v120
  %v137 = vunpack.c.l.b16 %v121
  %v138 = vpack.c.b16 %v131, %v130
  %v139 = vpack.c.b16 %v133, %v132
  %v140 = vpack.c.b16 %v135, %v134
  %v141 = vpack.c.b16 %v137, %v136
  %vm146 = vcmask 523264
  %v148 = vsel %vm146, %v111, 0
  %150 = vmatprep.subr.bf16.mxu0 0
  %151 = vmatpush1.bf16.msra.mxu0 %v138
  %152 = vmatprep.subr.bf16.mxu0 0
  %153 = vmatpush1.bf16.msra.mxu0 %v139
  %154 = vmatprep.subr.bf16.mxu0 0
  %155 = vmatpush1.bf16.msra.mxu0 %v140
  %156 = vmatprep.subr.bf16.mxu0 0
  %157 = vmatpush1.bf16.msra.mxu0 %v141
  %158 = vmatprep.subr.bf16.mxu0 0
  %159 = vmatpush1.bf16.msra.mxu0 0
  %160 = vmatprep.subr.bf16.mxu0 0
  %161 = vmatpush1.bf16.msra.mxu0 0
  %162 = vmatprep.subr.bf16.mxu0 0
  %163 = vmatpush1.bf16.msra.mxu0 0
  %164 = vmatprep.subr.bf16.mxu0 0
  %165 = vmatpush1.bf16.msra.mxu0 0
  %166 = vmatprep.subr.bf16.mxu0 0
  %167 = vmatpush1.bf16.msra.mxu0 0
  %168 = vmatprep.subr.bf16.mxu0 0
  %169 = vmatpush1.bf16.msra.mxu0 0
  %170 = vmatprep.subr.bf16.mxu0 0
  %171 = vmatpush1.bf16.msra.mxu0 0
  %172 = vmatprep.subr.bf16.mxu0 0
  %173 = vmatpush1.bf16.msra.mxu0 0
  %174 = vmatprep.subr.bf16.mxu0 0
  %175 = vmatpush1.bf16.msra.mxu0 0
  %176 = vmatprep.subr.bf16.mxu0 0
  %177 = vmatpush1.bf16.msra.mxu0 0
  %178 = vmatprep.subr.bf16.mxu0 0
  %179 = vmatpush1.bf16.msra.mxu0 0
  %180 = vmatprep.subr.bf16.mxu0 0
  %181 = vmatpush1.bf16.msra.mxu0 0
  %182 = vmatprep.mubr.bf16.mxu0 0
  %183 = vmatmul.mubr.bf16.gmra.mrb[0].mxu0 %v148
  %v184 = vpop.f32.mrb[0].mxu0
  %v185 = vadd.f32 0.0, %v184
  %v186 = vpop.f32.mrb[0].mxu0
  %v187 = vpop.f32.mrb[0].mxu0
  %v188 = vadd.f32 0.0, %v187
  %v189 = vpop.f32.mrb[0].mxu0
  %190 = vdwg.mxu0
  %v191 = vadd.f32 %v112, %v185
  %v192 = vadd.f32 %v113, %v188
  %193 = vst.msk [vmem:[#allocation2] sm:$0xff] %vm64, %v191
  %194 = vst.msk [vmem:[#allocation2 + $0x8] sm:$0xff] %vm64, %v192
  // Predicated region
  $region34: #{decoder_forward.15} parent=0 // pred_check
    %p195 = pneg %p27
  $region35: #{decoder_forward.15} parent=0 // pred_check_branch
    %197 = sbr.rel (%p195) target = $region37
  $region36: #{decoder_forward.15} parent=0 // pred_region
    %v198 = vld [vmem:[#allocation2] sm:$0xff]
    %v199 = vld [vmem:[#allocation2 + $0x8] sm:$0xff]
    %v200 = vld [vmem:[%s4] sm:$0x1]
    %v202 = vlaneseq
    %v203 = vshrl.u32 %v202, 7
    %v204 = vsub.s32 0, %v203
    %v205 = vrot.slane %v200, %v204
    %v207 = vadd.f32 %v198, %v205
    %v208 = vadd.f32 %v199, %v205
    %v209 = vunpack.c.l.bf16 %v34
    %v210 = vunpack.c.l.bf16 %v35
    %v211 = vadd.f32 %v207, %v209
    %v212 = vadd.f32 %v208, %v210
    %v213 = vsel %vm64, %v211, 0.0
    %214 = vadd.xlane.f32.xlu0 %v213
    %v215 = vpop.xlane.xlu0 %214
    %v216 = vsel %vm64, %v212, 0.0
    %217 = vadd.xlane.f32.xlu0 %v216
    %v218 = vpop.xlane.xlu0 %217
    %v219 = vrcp.pop 32.0
    %v220 = vmul.f32 %v215, %v219
    %v221 = vmul.f32 %v218, %v219
    %v222 = vsub.f32 %v211, %v220
    %v223 = vsub.f32 %v212, %v221
    %v224 = vmul.f32 %v222, %v222
    %v225 = vmul.f32 %v223, %v223
    %v226 = vsel %vm64, %v224, 0.0
    %227 = vadd.xlane.f32.xlu0 %v226
    %v228 = vpop.xlane.xlu0 %227
    %v229 = vsel %vm64, %v225, 0.0
    %230 = vadd.xlane.f32.xlu0 %v229
    %v231 = vpop.xlane.xlu0 %230
    %v232 = vmul.f32 %v228, %v219
    %v233 = vmul.f32 %v231, %v219
    %v234 = vadd.f32 %v232, 1e-05
    %v235 = vadd.f32 %v233, 1e-05
    %v236 = vrsqrt.pop %v234
    %v237 = vrsqrt.pop %v235
    %v238 = vmul.f32 %v222, %v236
    %v239 = vmul.f32 %v223, %v237
    %v240 = vld [vmem:[%s5] sm:$0x1]
    %v242 = vlaneseq
    %v243 = vshrl.u32 %v242, 7
    %v244 = vsub.s32 0, %v243
    %v245 = vrot.slane %v240, %v244
    %v247 = vmul.f32 %v238, %v245
    %v248 = vmul.f32 %v239, %v245
    %v249 = vld [vmem:[%s6] sm:$0x1]
    %v251 = vlaneseq
    %v252 = vshrl.u32 %v251, 7
    %v253 = vsub.s32 0, %v252
    %v254 = vrot.slane %v249, %v253
    %v256 = vadd.f32 %v247, %v254
    %v257 = vadd.f32 %v248, %v254
    %v258 = vpack.c.bf16 %v257, %v256
    %v260 = vunpack.c.l.b16 %v258
    %v261 = vunpack.c.h.b16 %v258
    %v262 = vpack.c.b16 %v260, %v260
    %v263 = vpack.c.b16 %v261, %v261
    %vm266 = vcmask 257024
    %267 = vst.msk [vmem:[%s7] sm:$0xf] %vm266, %v262
    %268 = vst.msk [vmem:[%s7 + $0x4] sm:$0xf] %vm266, %v263
  $region37: #{decoder_forward.15} parent=0 // pred_fallthru
    _
  // Predicated region
  $region38: #{decoder_forward.15} parent=0 // pred_check
    _
  $region39: #{decoder_forward.15} parent=0 // pred_check_branch
    %270 = sbr.rel (0) target = $region41
  $region40: #{decoder_forward.15} parent=0 // pred_region
    _
  $region41: #{decoder_forward.15} parent=0 // pred_fallthru
    _
  // Predicated region
  $region42: #{decoder_forward.15} parent=0 // pred_check
    _
  $region43: #{decoder_forward.15} parent=0 // pred_check_branch
    %272 = sbr.rel (0) target = $region45
  $region44: #{decoder_forward.15} parent=0 // pred_region
    _
  $region45: #{decoder_forward.15} parent=0 // pred_fallthru
    _

// kernel: decoder_forward.21
$region0: #{decoder_forward.21}
  #allocation0 [shape = 'u32[]', space=smem, size = 0x4, offset = 0x4, fixed_abs, tag = 'smem constant byte address 0x4 - core index']
  #allocation1 [shape = 'u32[144,128]{1,0:T(1,128)}', space=vmem, size = 0x12000, scoped, tag = 'internal scratch']
  %s0 = inlined_call_operand.vmem [shape: bf16[16,32], index: 0, kind: input, shape index: {}]
  %s1 = inlined_call_operand.vmem [shape: f32[1,32], index: 1, kind: input, shape index: {}]
  %s2 = inlined_call_operand.vmem [shape: f32[1,32], index: 2, kind: input, shape index: {}]
  %s3 = inlined_call_operand.hbm [shape: f32[16,32], index: 3, kind: output, shape index: {}]
  %s4 = sld [smem:[#allocation0]]
  $region22: #{decoder_forward.21} parent=0
    _
  %s6 = ssub.s32 1, %s4
  %s7 = scalar_select 0, %s6, %s4
  $region1: #{decoder_forward.21} parent=0
    #allocation2 [shape = 'u8[8192]{0}', space=vmem, size = 0x2000, scoped, tag = 'output window, operand 0, single buffered']
    #allocation3 [shape = 's32[1]{0}', space=sflag, size = 0x4, scoped, tag = 'scoped memory for decoder_forward.21']
    %8 = vsyncpa [#allocation3], 0
    // Predicated region
    $region2: #{decoder_forward.21} parent=1 // pred_check
      _
    $region3: #{decoder_forward.21} parent=1 // pred_check_branch
      %10 = sbr.rel (0) target = $region5
    $region4: #{decoder_forward.21} parent=1 // pred_region
      _
    $region5: #{decoder_forward.21} parent=1 // pred_fallthru
      _
    // Predicated region
    $region6: #{decoder_forward.21} parent=1 // pred_check
      _
    $region7: #{decoder_forward.21} parent=1 // pred_check_branch
      %12 = sbr.rel (0) target = $region9
    $region8: #{decoder_forward.21} parent=1 // pred_region
      _
    $region9: #{decoder_forward.21} parent=1 // pred_fallthru
      _
    // Predicated region
    $region10: #{decoder_forward.21} parent=1 // pred_check
      _
    $region11: #{decoder_forward.21} parent=1 // pred_check_branch
      %14 = sbr.rel (0) target = $region13
    $region12: #{decoder_forward.21} parent=1 // pred_region
      _
    $region13: #{decoder_forward.21} parent=1 // pred_fallthru
      _
    %v15 = vld [vmem:[%s0] sm:$0xf]
    %v16 = vld [vmem:[%s0 + $0x4] sm:$0xf]
    %v17 = vunpack.c.l.bf16 %v15
    %v18 = vunpack.c.l.bf16 %v16
    %vm19 = vcmask 261120
    %v20 = vsel %vm19, %v17, 0.0
    %21 = vadd.xlane.f32.xlu0 %v20
    %v22 = vpop.xlane.xlu0 %21
    %v23 = vsel %vm19, %v18, 0.0
    %24 = vadd.xlane.f32.xlu0 %v23
    %v25 = vpop.xlane.xlu0 %24
    %v26 = vrcp.pop 32.0
    %v27 = vmul.f32 %v22, %v26
    %v28 = vmul.f32 %v25, %v26
    %v29 = vsub.f32 %v17, %v27
    %v30 = vsub.f32 %v18, %v28
    %v31 = vmul.f32 %v29, %v29
    %v32 = vmul.f32 %v30, %v30
    %v33 = vsel %vm19, %v31, 0.0
    %34 = vadd.xlane.f32.xlu0 %v33
    %v35 = vpop.xlane.xlu0 %34
    %v36 = vsel %vm19, %v32, 0.0
    %37 = vadd.xlane.f32.xlu0 %v36
    %v38 = vpop.xlane.xlu0 %37
    %v39 = vmul.f32 %v35, %v26
    %v40 = vmul.f32 %v38, %v26
    %v41 = vadd.f32 %v39, 1e-05
    %v42 = vadd.f32 %v40, 1e-05
    %v43 = vrsqrt.pop %v41
    %v44 = vrsqrt.pop %v42
    %v45 = vmul.f32 %v29, %v43
    %v46 = vmul.f32 %v30, %v44
    %v47 = vld [vmem:[%s1] sm:$0x1]
    %v49 = vlaneseq
    %v50 = vshrl.u32 %v49, 7
    %v51 = vsub.s32 0, %v50
    %v52 = vrot.slane %v47, %v51
    %v54 = vmul.f32 %v45, %v52
    %v55 = vmul.f32 %v46, %v52
    %v56 = vld [vmem:[%s2] sm:$0x1]
    %v58 = vlaneseq
    %v59 = vshrl.u32 %v58, 7
    %v60 = vsub.s32 0, %v59
    %v61 = vrot.slane %v56, %v60
    %v63 = vadd.f32 %v54, %v61
    %v64 = vadd.f32 %v55, %v61
    %65 = vst.msk [vmem:[#allocation2] sm:$0xff] %vm19, %v63
    %66 = vst.msk [vmem:[#allocation2 + $0x8] sm:$0xff] %vm19, %v64
    // Predicated region
    $region14: #{decoder_forward.21} parent=1 // pred_check
      _
    $region15: #{decoder_forward.21} parent=1 // pred_check_branch
      %68 = sbr.rel (0) target = $region17
    $region16: #{decoder_forward.21} parent=1 // pred_region
      %s70 = ssub.s32 256, 256
      %71 = vsyncadd [#allocation3], %s70
      %s72 = sshll.u32 [#allocation2], 4
      %s73 = int_to_ptr.vmem [resolvable:$true] %s72
      %78 = dma.vmem_to_hbm [thread:$0]  %s73, 256, %s3, [#allocation3], 128, 128, 8
    $region17: #{decoder_forward.21} parent=1 // pred_fallthru
      _
    // Predicated region
    $region18: #{decoder_forward.21} parent=1 // pred_check
      _
    $region19: #{decoder_forward.21} parent=1 // pred_check_branch
      %80 = sbr.rel (0) target = $region21
    $region20: #{decoder_forward.21} parent=1 // pred_region
      %81 = dma.done [#allocation3], 256
    $region21: #{decoder_forward.21} parent=1 // pred_fallthru
      _
    %82 = vsyncpa [#allocation3], 1

// kernel: decoder_forward.11
$region0: #{decoder_forward.11}
  #allocation0 [shape = 'u32[]', space=smem, size = 0x4, offset = 0x4, fixed_abs, tag = 'smem constant byte address 0x4 - core index']
  #allocation1 [shape = 'u32[144,128]{1,0:T(1,128)}', space=vmem, size = 0x12000, scoped, tag = 'internal scratch']
  %s0 = inlined_call_operand.vmem [shape: bf16[2,8,32], index: 0, kind: input, shape index: {}, may-alias: {0,1}]
  %s1 = inlined_call_operand.vmem [shape: bf16[2,8,32], index: 1, kind: input, shape index: {}, may-alias: {0,1}]
  %s2 = inlined_call_operand.vmem [shape: bf16[32,32], index: 2, kind: input, shape index: {}]
  %s3 = inlined_call_operand.vmem [shape: f32[1,32], index: 3, kind: input, shape index: {}]
  %s4 = inlined_call_operand.vmem [shape: bf16[32,64], index: 4, kind: input, shape index: {}]
  %s5 = inlined_call_operand.vmem [shape: f32[1,64], index: 5, kind: input, shape index: {}]
  %s6 = inlined_call_operand.vmem [shape: f32[2,8,8], index: 6, kind: input, shape index: {}]
  %s7 = inlined_call_operand.vmem [shape: bf16[2,8,32], index: 7, kind: output, shape index: {}]
  %s8 = sld [smem:[#allocation0]]
  $region61: #{decoder_forward.11} parent=0
    _
  %s10 = ssub.s32 1, %s8
  %s11 = scalar_select 0, %s10, %s8
  loop: start=0, step=1, limit=4
  $region2: #{decoder_forward.11} parent=0 // loop_pre_header
    _
  $region3: #{decoder_forward.11} parent=0 // loop_header
    %s13 = sphi 0, %s17
    %p14 = scmp.ge.s32.totalorder %s13, 4
    %s23 = sphi 0, %s25
    %s26 = sphi 0, %s23
    %s27 = sphi 0, %s26
    %s43 = sphi 0, %s27
    %s49 = sphi 0, %s51
    %s52 = sphi 0, %s49
    %s53 = sphi 0, %s52
    %s69 = sphi 0, %s53
    %s73 = sphi 0, %s73
    %s75 = sphi 0, %s73
    %s76 = sphi 0, %s75
    %s90 = sphi 0, %s76
    %s94 = sphi 0, %s94
    %s96 = sphi 0, %s94
    %s97 = sphi 0, %s96
    %s111 = sphi 0, %s97
    %s115 = sphi 0, %s115
    %s117 = sphi 0, %s115
    %s118 = sphi 0, %s117
    %s132 = sphi 0, %s118
    %s136 = sphi 0, %s136
    %s138 = sphi 0, %s136
    %s139 = sphi 0, %s138
    %s153 = sphi 0, %s139
    %s159 = sphi 0, %s161
    %s162 = sphi 0, %s159
    %s163 = sphi 0, %s162
    %s179 = sphi 0, %s163
    %s185 = sphi 0, %s187
    %s188 = sphi 0, %s185
    %s189 = sphi 0, %s188
    %s205 = sphi 0, %s189
  $region4: #{decoder_forward.11} parent=0 // loop_header_branch
    %16 = sbr.rel (%p14) target = $region8
  $region5: #{decoder_forward.11} parent=0 // loop_body
    %s18 = ssub.s32 %s13, 1
    %s19 = ssub.s32 %s13, 2
    %s20 = sadd.s32 %s13, 1
    %s21 = ssub.s32 %s13, %s20
    %p22 = scmp.eq.s32.totalorder %s21, 0
    %s24 = sadd.s32 %s23, 1
    %s25 = scalar_select %p22, %s23, %s24
    %p28 = pneg %p22
    %p29 = scmp.eq.s32.totalorder %s13, 1
    %p30 = por %p28, %p29
    %p31 = scmp.ne.s32.totalorder %s23, %s26
    %p32 = scmp.eq.s32.totalorder %s13, 0
    %p33 = por %p31, %p32
    %p34 = scmp.ne.s32.totalorder %s23, %s26
    %p35 = scmp.eq.s32.totalorder %s18, 1
    %p36 = por %p34, %p35
    %p37 = scmp.ne.s32.totalorder %s26, %s27
    %p38 = scmp.eq.s32.totalorder %s18, 0
    %p39 = por %p37, %p38
    %p40 = scmp.ne.s32.totalorder %s26, %s27
    %p41 = scmp.eq.s32.totalorder %s19, 1
    %p42 = por %p40, %p41
    %p44 = scmp.ne.s32.totalorder %s27, %s43
    %p45 = scmp.eq.s32.totalorder %s19, 0
    %p46 = por %p44, %p45
    %s47 = ssub.s32 %s13, %s20
    %p48 = scmp.eq.s32.totalorder %s47, 0
    %s50 = sadd.s32 %s49, 1
    %s51 = scalar_select %p48, %s49, %s50
    %p54 = pneg %p48
    %p55 = scmp.eq.s32.totalorder %s13, 1
    %p56 = por %p54, %p55
    %p57 = scmp.ne.s32.totalorder %s49, %s52
    %p58 = scmp.eq.s32.totalorder %s13, 0
    %p59 = por %p57, %p58
    %p60 = scmp.ne.s32.totalorder %s49, %s52
    %p61 = scmp.eq.s32.totalorder %s18, 1
    %p62 = por %p60, %p61
    %p63 = scmp.ne.s32.totalorder %s52, %s53
    %p64 = scmp.eq.s32.totalorder %s18, 0
    %p65 = por %p63, %p64
    %p66 = scmp.ne.s32.totalorder %s52, %s53
    %p67 = scmp.eq.s32.totalorder %s19, 1
    %p68 = por %p66, %p67
    %p70 = scmp.ne.s32.totalorder %s53, %s69
    %p71 = scmp.eq.s32.totalorder %s19, 0
    %p72 = por %p70, %p71
    %s74 = sadd.s32 %s73, 1
    %p77 = scmp.eq.s32.totalorder %s13, 1
    %p78 = scmp.ne.s32.totalorder %s73, %s75
    %p79 = scmp.eq.s32.totalorder %s13, 0
    %p80 = por %p78, %p79
    %p81 = scmp.ne.s32.totalorder %s73, %s75
    %p82 = scmp.eq.s32.totalorder %s18, 1
    %p83 = por %p81, %p82
    %p84 = scmp.ne.s32.totalorder %s75, %s76
    %p85 = scmp.eq.s32.totalorder %s18, 0
    %p86 = por %p84, %p85
    %p87 = scmp.ne.s32.totalorder %s75, %s76
    %p88 = scmp.eq.s32.totalorder %s19, 1
    %p89 = por %p87, %p88
    %p91 = scmp.ne.s32.totalorder %s76, %s90
    %p92 = scmp.eq.s32.totalorder %s19, 0
    %p93 = por %p91, %p92
    %s95 = sadd.s32 %s94, 1
    %p98 = scmp.eq.s32.totalorder %s13, 1
    %p99 = scmp.ne.s32.totalorder %s94, %s96
    %p100 = scmp.eq.s32.totalorder %s13, 0
    %p101 = por %p99, %p100
    %p102 = scmp.ne.s32.totalorder %s94, %s96
    %p103 = scmp.eq.s32.totalorder %s18, 1
    %p104 = por %p102, %p103
    %p105 = scmp.ne.s32.totalorder %s96, %s97
    %p106 = scmp.eq.s32.totalorder %s18, 0
    %p107 = por %p105, %p106
    %p108 = scmp.ne.s32.totalorder %s96, %s97
    %p109 = scmp.eq.s32.totalorder %s19, 1
    %p110 = por %p108, %p109
    %p112 = scmp.ne.s32.totalorder %s97, %s111
    %p113 = scmp.eq.s32.totalorder %s19, 0
    %p114 = por %p112, %p113
    %s116 = sadd.s32 %s115, 1
    %p119 = scmp.eq.s32.totalorder %s13, 1
    %p120 = scmp.ne.s32.totalorder %s115, %s117
    %p121 = scmp.eq.s32.totalorder %s13, 0
    %p122 = por %p120, %p121
    %p123 = scmp.ne.s32.totalorder %s115, %s117
    %p124 = scmp.eq.s32.totalorder %s18, 1
    %p125 = por %p123, %p124
    %p126 = scmp.ne.s32.totalorder %s117, %s118
    %p127 = scmp.eq.s32.totalorder %s18, 0
    %p128 = por %p126, %p127
    %p129 = scmp.ne.s32.totalorder %s117, %s118
    %p130 = scmp.eq.s32.totalorder %s19, 1
    %p131 = por %p129, %p130
    %p133 = scmp.ne.s32.totalorder %s118, %s132
    %p134 = scmp.eq.s32.totalorder %s19, 0
    %p135 = por %p133, %p134
    %s137 = sadd.s32 %s136, 1
    %p140 = scmp.eq.s32.totalorder %s13, 1
    %p141 = scmp.ne.s32.totalorder %s136, %s138
    %p142 = scmp.eq.s32.totalorder %s13, 0
    %p143 = por %p141, %p142
    %p144 = scmp.ne.s32.totalorder %s136, %s138
    %p145 = scmp.eq.s32.totalorder %s18, 1
    %p146 = por %p144, %p145
    %p147 = scmp.ne.s32.totalorder %s138, %s139
    %p148 = scmp.eq.s32.totalorder %s18, 0
    %p149 = por %p147, %p148
    %p150 = scmp.ne.s32.totalorder %s138, %s139
    %p151 = scmp.eq.s32.totalorder %s19, 1
    %p152 = por %p150, %p151
    %p154 = scmp.ne.s32.totalorder %s139, %s153
    %p155 = scmp.eq.s32.totalorder %s19, 0
    %p156 = por %p154, %p155
    %s157 = ssub.s32 %s13, %s20
    %p158 = scmp.eq.s32.totalorder %s157, 0
    %s160 = sadd.s32 %s159, 1
    %s161 = scalar_select %p158, %s159, %s160
    %p164 = pneg %p158
    %p165 = scmp.eq.s32.totalorder %s13, 1
    %p166 = por %p164, %p165
    %p167 = scmp.ne.s32.totalorder %s159, %s162
    %p168 = scmp.eq.s32.totalorder %s13, 0
    %p169 = por %p167, %p168
    %p170 = scmp.ne.s32.totalorder %s159, %s162
    %p171 = scmp.eq.s32.totalorder %s18, 1
    %p172 = por %p170, %p171
    %p173 = scmp.ne.s32.totalorder %s162, %s163
    %p174 = scmp.eq.s32.totalorder %s18, 0
    %p175 = por %p173, %p174
    %p176 = scmp.ne.s32.totalorder %s162, %s163
    %p177 = scmp.eq.s32.totalorder %s19, 1
    %p178 = por %p176, %p177
    %p180 = scmp.ne.s32.totalorder %s163, %s179
    %p181 = scmp.eq.s32.totalorder %s19, 0
    %p182 = por %p180, %p181
    %s183 = ssub.s32 %s13, %s20
    %p184 = scmp.eq.s32.totalorder %s183, 0
    %s186 = sadd.s32 %s185, 1
    %s187 = scalar_select %p184, %s185, %s186
    %p190 = pneg %p184
    %p191 = scmp.eq.s32.totalorder %s13, 1
    %p192 = por %p190, %p191
    %p193 = scmp.ne.s32.totalorder %s185, %s188
    %p194 = scmp.eq.s32.totalorder %s13, 0
    %p195 = por %p193, %p194
    %p196 = scmp.ne.s32.totalorder %s185, %s188
    %p197 = scmp.eq.s32.totalorder %s18, 1
    %p198 = por %p196, %p197
    %p199 = scmp.ne.s32.totalorder %s188, %s189
    %p200 = scmp.eq.s32.totalorder %s18, 0
    %p201 = por %p199, %p200
    %p202 = scmp.ne.s32.totalorder %s188, %s189
    %p203 = scmp.eq.s32.totalorder %s19, 1
    %p204 = por %p202, %p203
    %p206 = scmp.ne.s32.totalorder %s189, %s205
    %p207 = scmp.eq.s32.totalorder %s19, 0
    %p208 = por %p206, %p207
    %p209 = scmp.le.s32.totalorder 1, %s13
    %p210 = scmp.lt.s32.totalorder %s13, 3
    %p211 = pnand %p209, %p210
    %p212 = pneg %p211
    // Predicated region
    $region9: #{decoder_forward.11} parent=5 // pred_check
      _
    $region10: #{decoder_forward.11} parent=5 // pred_check_branch
      %214 = sbr.rel (%p211) target = $region12
    $region11: #{decoder_forward.11} parent=5 // pred_region
      %s215 = ssub.s32 %s13, 1
      // Predicated region
      $region13: #{decoder_forward.11} parent=11 // pred_check
        %p216 = pneg %p86
      $region14: #{decoder_forward.11} parent=11 // pred_check_branch
        %218 = sbr.rel (%p216) target = $region16
      $region15: #{decoder_forward.11} parent=11 // pred_region
        _
      $region16: #{decoder_forward.11} parent=11 // pred_fallthru
        _
      // Predicated region
      $region17: #{decoder_forward.11} parent=11 // pred_check
        %p219 = pneg %p107
      $region18: #{decoder_forward.11} parent=11 // pred_check_branch
        %221 = sbr.rel (%p219) target = $region20
      $region19: #{decoder_forward.11} parent=11 // pred_region
        _
      $region20: #{decoder_forward.11} parent=11 // pred_fallthru
        _
      // Predicated region
      $region21: #{decoder_forward.11} parent=11 // pred_check
        %p222 = pneg %p128
      $region22: #{decoder_forward.11} parent=11 // pred_check_branch
        %224 = sbr.rel (%p222) target = $region24
      $region23: #{decoder_forward.11} parent=11 // pred_region
        _
      $region24: #{decoder_forward.11} parent=11 // pred_fallthru
        _
      // Predicated region
      $region25: #{decoder_forward.11} parent=11 // pred_check
        %p225 = pneg %p149
      $region26: #{decoder_forward.11} parent=11 // pred_check_branch
        %227 = sbr.rel (%p225) target = $region28
      $region27: #{decoder_forward.11} parent=11 // pred_region
        _
      $region28: #{decoder_forward.11} parent=11 // pred_fallthru
        _
    $region12: #{decoder_forward.11} parent=5 // pred_fallthru
      _
    %p228 = scmp.lt.s32.totalorder %s13, 2
    // Predicated region
    $region29: #{decoder_forward.11} parent=5 // pred_check
      %p229 = pneg %p228
    $region30: #{decoder_forward.11} parent=5 // pred_check_branch
      %231 = sbr.rel (%p229) target = $region32
    $region31: #{decoder_forward.11} parent=5 // pred_region
      // Predicated region
      $region33: #{decoder_forward.11} parent=31 // pred_check
        %p232 = pneg %p33
      $region34: #{decoder_forward.11} parent=31 // pred_check_branch
        %234 = sbr.rel (%p232) target = $region36
      $region35: #{decoder_forward.11} parent=31 // pred_region
        %p235 = scmp.lt.s32.totalorder %s13, 1
        %s236 = scalar_select %p235, %s13, 1
        %s237 = smul.addr %s236, 4
        %s238 = scalar_lea.vmem %s0, %s237
      $region36: #{decoder_forward.11} parent=31 // pred_fallthru
        _
      // Predicated region
      $region37: #{decoder_forward.11} parent=31 // pred_check
        %p239 = pneg %p59
      $region38: #{decoder_forward.11} parent=31 // pred_check_branch
        %241 = sbr.rel (%p239) target = $region40
      $region39: #{decoder_forward.11} parent=31 // pred_region
        %p242 = scmp.lt.s32.totalorder %s13, 1
        %s243 = scalar_select %p242, %s13, 1
        %s244 = smul.addr %s243, 4
        %s245 = scalar_lea.vmem %s1, %s244
      $region40: #{decoder_forward.11} parent=31 // pred_fallthru
        _
      // Predicated region
      $region41: #{decoder_forward.11} parent=31 // pred_check
        %p246 = pneg %p169
      $region42: #{decoder_forward.11} parent=31 // pred_check_branch
        %248 = sbr.rel (%p246) target = $region44
      $region43: #{decoder_forward.11} parent=31 // pred_region
        %p249 = scmp.lt.s32.totalorder %s13, 1
        %s250 = scalar_select %p249, %s13, 1
        %s251 = smul.addr %s250, 8
        %s252 = scalar_lea.vmem %s6, %s251
      $region44: #{decoder_forward.11} parent=31 // pred_fallthru
        _
    $region32: #{decoder_forward.11} parent=5 // pred_fallthru
      _
    %p253 = scmp.le.s32.totalorder 1, %s13
    %p254 = scmp.lt.s32.totalorder %s13, 3
    %p255 = pnand %p253, %p254
    %p256 = pneg %p255
    // Predicated region
    $region45: #{decoder_forward.11} parent=5 // pred_check
      _
    $region46: #{decoder_forward.11} parent=5 // pred_check_branch
      %258 = sbr.rel (%p255) target = $region48
    $region47: #{decoder_forward.11} parent=5 // pred_region
      %s259 = ssub.s32 %s13, 1
      %p260 = scmp.lt.s32.totalorder %s18, 1
      %s261 = scalar_select %p260, %s18, 1
      %s262 = smul.addr %s261, 4
      %s263 = scalar_lea.vmem %s0, %s262
      %p264 = pneg %p39
      %p265 = pneg %p36
      %p266 = scmp.lt.s32.totalorder %s18, 1
      %s267 = scalar_select %p266, %s18, 1
      %s268 = smul.addr %s267, 4
      %s269 = scalar_lea.vmem %s1, %s268
      %p270 = pneg %p65
      %p271 = pneg %p62
      %p272 = pneg %p86
      %p273 = pneg %p83
      %p274 = pneg %p107
      %p275 = pneg %p104
      %p276 = pneg %p128
      %p277 = pneg %p125
      %p278 = pneg %p149
      %p279 = pneg %p146
      %p280 = scmp.lt.s32.totalorder %s18, 1
      %s281 = scalar_select %p280, %s18, 1
      %s282 = smul.addr %s281, 8
      %s283 = scalar_lea.vmem %s6, %s282
      %p284 = pneg %p175
      %p285 = pneg %p172
      %p286 = pneg %p201
      %p287 = pneg %p198
      %p288 = scmp.lt.s32.totalorder %s18, 1
      %s289 = scalar_select %p288, %s18, 1
      %s290 = smul.addr %s289, 4
      %s291 = scalar_lea.vmem %s7, %s290
      %p292 = scmp.lt.s32.totalorder %s18, 1
      %s293 = scalar_select %p292, %s18, 1
      %s294 = smul.addr %s293, 4
      %s295 = scalar_lea.vmem %s0, %s294
      %p296 = scmp.lt.s32.totalorder %s18, 1
      %s297 = scalar_select %p296, %s18, 1
      %s298 = smul.addr %s297, 4
      %s299 = scalar_lea.vmem %s1, %s298
      %p300 = scmp.lt.s32.totalorder %s18, 1
      %s301 = scalar_select %p300, %s18, 1
      %s302 = smul.addr %s301, 8
      %s303 = scalar_lea.vmem %s6, %s302
      %p304 = scmp.lt.s32.totalorder %s18, 1
      %s305 = scalar_select %p304, %s18, 1
      %s306 = smul.addr %s305, 4
      %s307 = scalar_lea.vmem %s7, %s306
      %v309 = vld [vmem:[%s295] sm:$0xf]
      %v310 = vld [vmem:[%s299] sm:$0xf]
      %v311 = vld [vmem:[%s303] sm:$0xff]
      %v312 = vld [vmem:[%s2] sm:$0xf]
      %v313 = vld [vmem:[%s2 + $0x4] sm:$0xf]
      %v314 = vld [vmem:[%s2 + $0x8] sm:$0xf]
      %v315 = vld [vmem:[%s2 + $0xc] sm:$0xf]
      %v316 = vld [vmem:[%s3] sm:$0x1]
      %v318 = vlaneseq
      %v319 = vshrl.u32 %v318, 7
      %v320 = vsub.s32 0, %v319
      %v321 = vrot.slane %v316, %v320
      %v327 = vunpack.c.l.b16 %v312
      %v328 = vunpack.c.l.b16 %v313
      %v329 = vunpack.c.l.b16 %v314
      %v330 = vunpack.c.l.b16 %v315
      %v331 = vpack.c.b16 %v328, %v327
      %v332 = vpack.c.b16 %v330, %v329
      %vm335 = vcmask 261120
      %v337 = vsel %vm335, %v309, 0
      %339 = vmatprep.subr.bf16.mxu0 0
      %340 = vmatpush1.bf16.msra.mxu0 %v331
      %341 = vmatprep.subr.bf16.mxu0 0
      %342 = vmatpush1.bf16.msra.mxu0 %v332
      %343 = vmatprep.subr.bf16.mxu0 0
      %344 = vmatpush1.bf16.msra.mxu0 0
      %345 = vmatprep.subr.bf16.mxu0 0
      %346 = vmatpush1.bf16.msra.mxu0 0
      %347 = vmatprep.subr.bf16.mxu0 0
      %348 = vmatpush1.bf16.msra.mxu0 0
      %349 = vmatprep.subr.bf16.mxu0 0
      %350 = vmatpush1.bf16.msra.mxu0 0
      %351 = vmatprep.subr.bf16.mxu0 0
      %352 = vmatpush1.bf16.msra.mxu0 0
      %353 = vmatprep.subr.bf16.mxu0 0
      %354 = vmatpush1.bf16.msra.mxu0 0
      %355 = vmatprep.subr.bf16.mxu0 0
      %356 = vmatpush1.bf16.msra.mxu0 0
      %357 = vmatprep.subr.bf16.mxu0 0
      %358 = vmatpush1.bf16.msra.mxu0 0
      %359 = vmatprep.subr.bf16.mxu0 0
      %360 = vmatpush1.bf16.msra.mxu0 0
      %361 = vmatprep.subr.bf16.mxu0 0
      %362 = vmatpush1.bf16.msra.mxu0 0
      %363 = vmatprep.subr.bf16.mxu0 0
      %364 = vmatpush1.bf16.msra.mxu0 0
      %365 = vmatprep.subr.bf16.mxu0 0
      %366 = vmatpush1.bf16.msra.mxu0 0
      %367 = vmatprep.subr.bf16.mxu0 0
      %368 = vmatpush1.bf16.msra.mxu0 0
      %369 = vmatprep.subr.bf16.mxu0 0
      %370 = vmatpush1.bf16.msra.mxu0 0
      %371 = vmatprep.mubr.bf16.mxu0 0
      %372 = vmatmul.mubr.bf16.gmra.mrb[0].mxu0 %v337
      %v373 = vpop.f32.mrb[0].mxu0
      %v374 = vadd.f32 %v321, %v373
      %v375 = vpop.f32.mrb[0].mxu0
      %v376 = vpop.f32.mrb[0].mxu0
      %v377 = vpop.f32.mrb[0].mxu0
      %378 = vdwg.mxu0
      %v379 = vld [vmem:[%s4] sm:$0xf]
      %v380 = vld [vmem:[%s4 + $0x4] sm:$0xf]
      %v381 = vld [vmem:[%s4 + $0x8] sm:$0xf]
      %v382 = vld [vmem:[%s4 + $0xc] sm:$0xf]
      %v383 = vld [vmem:[%s5] sm:$0x1]
      %v385 = vlaneseq
      %v386 = vshrl.u32 %v385, 7
      %v387 = vsub.s32 0, %v386
      %v388 = vrot.slane %v383, %v387
      %v394 = vunpack.c.l.b16 %v379
      %v395 = vunpack.c.l.b16 %v380
      %v396 = vunpack.c.l.b16 %v381
      %v397 = vunpack.c.l.b16 %v382
      %v398 = vpack.c.b16 %v395, %v394
      %v399 = vpack.c.b16 %v397, %v396
      %v403 = vsel %vm335, %v310, 0
      %405 = vmatprep.subr.bf16.mxu0 0
      %406 = vmatpush1.bf16.msra.mxu0 %v398
      %407 = vmatprep.subr.bf16.mxu0 0
      %408 = vmatpush1.bf16.msra.mxu0 %v399
      %409 = vmatprep.subr.bf16.mxu0 0
      %410 = vmatpush1.bf16.msra.mxu0 0
      %411 = vmatprep.subr.bf16.mxu0 0
      %412 = vmatpush1.bf16.msra.mxu0 0
      %413 = vmatprep.subr.bf16.mxu0 0
      %414 = vmatpush1.bf16.msra.mxu0 0
      %415 = vmatprep.subr.bf16.mxu0 0
      %416 = vmatpush1.bf16.msra.mxu0 0
      %417 = vmatprep.subr.bf16.mxu0 0
      %418 = vmatpush1.bf16.msra.mxu0 0
      %419 = vmatprep.subr.bf16.mxu0 0
      %420 = vmatpush1.bf16.msra.mxu0 0
      %421 = vmatprep.subr.bf16.mxu0 0
      %422 = vmatpush1.bf16.msra.mxu0 0
      %423 = vmatprep.subr.bf16.mxu0 0
      %424 = vmatpush1.bf16.msra.mxu0 0
      %425 = vmatprep.subr.bf16.mxu0 0
      %426 = vmatpush1.bf16.msra.mxu0 0
      %427 = vmatprep.subr.bf16.mxu0 0
      %428 = vmatpush1.bf16.msra.mxu0 0
      %429 = vmatprep.subr.bf16.mxu0 0
      %430 = vmatpush1.bf16.msra.mxu0 0
      %431 = vmatprep.subr.bf16.mxu0 0
      %432 = vmatpush1.bf16.msra.mxu0 0
      %433 = vmatprep.subr.bf16.mxu0 0
      %434 = vmatpush1.bf16.msra.mxu0 0
      %435 = vmatprep.subr.bf16.mxu0 0
      %436 = vmatpush1.bf16.msra.mxu0 0
      %437 = vmatprep.mubr.bf16.mxu0 0
      %438 = vmatmul.mubr.bf16.gmra.mrb[0].mxu0 %v403
      %v439 = vpop.f32.mrb[0].mxu0
      %v440 = vadd.f32 %v388, %v439
      %v441 = vpop.f32.mrb[0].mxu0
      %v442 = vpop.f32.mrb[0].mxu0
      %v443 = vpop.f32.mrb[0].mxu0
      %444 = vdwg.mxu0
      %v445 = vmul.f32 %v374, 0.35355338
      %v446 = vpack.c.bf16 %v445, %v445
      %v447 = vpack.c.bf16 %v440, %v440
      %vm448 = vcmask 64512
      %v450 = vsel %vm448, %v446, 0
      %v453 = vsel %vm448, %v447, 0
      %455 = vmatprep.subr.bf16.mxu0 0
      %456 = vmatpush1.bf16.xpose.msra.mxu0 %v453
      %457 = vmatprep.subr.bf16.mxu0 0
      %458 = vmatpush1.bf16.xpose.msra.mxu0 0
      %459 = vmatprep.subr.bf16.mxu0 0
      %460 = vmatpush1.bf16.xpose.msra.mxu0 0
      %461 = vmatprep.subr.bf16.mxu0 0
      %462 = vmatpush1.bf16.xpose.msra.mxu0 0
      %463 = vmatprep.subr.bf16.mxu0 0
      %464 = vmatpush1.bf16.xpose.msra.mxu0 0
      %465 = vmatprep.subr.bf16.mxu0 0
      %466 = vmatpush1.bf16.xpose.msra.mxu0 0
      %467 = vmatprep.subr.bf16.mxu0 0
      %468 = vmatpush1.bf16.xpose.msra.mxu0 0
      %469 = vmatprep.subr.bf16.mxu0 0
      %470 = vmatpush1.bf16.xpose.msra.mxu0 0
      %471 = vmatprep.subr.bf16.mxu0 0
      %472 = vmatpush1.bf16.xpose.msra.mxu0 0
      %473 = vmatprep.subr.bf16.mxu0 0
      %474 = vmatpush1.bf16.xpose.msra.mxu0 0
      %475 = vmatprep.subr.bf16.mxu0 0
      %476 = vmatpush1.bf16.xpose.msra.mxu0 0
      %477 = vmatprep.subr.bf16.mxu0 0
      %478 = vmatpush1.bf16.xpose.msra.mxu0 0
      %479 = vmatprep.subr.bf16.mxu0 0
      %480 = vmatpush1.bf16.xpose.msra.mxu0 0
      %481 = vmatprep.subr.bf16.mxu0 0
      %482 = vmatpush1.bf16.xpose.msra.mxu0 0
      %483 = vmatprep.subr.bf16.mxu0 0
      %484 = vmatpush1.bf16.xpose.msra.mxu0 0
      %485 = vmatprep.subr.bf16.mxu0 0
      %486 = vmatpush1.bf16.xpose.msra.mxu0 0
      %487 = vmatprep.mubr.bf16.mxu0 0
      %488 = vmatmul.mubr.bf16.gmra.mrb[0].mxu0 %v450
      %v489 = vpop.f32.mrb[0].mxu0
      %v490 = vadd.f32 0.0, %v489
      %v491 = vpop.f32.mrb[0].mxu0
      %v492 = vpop.f32.mrb[0].mxu0
      %v493 = vpop.f32.mrb[0].mxu0
      %494 = vdwg.mxu0
      %vm495 = vcmp.gt.f32.partialorder %v311, 0.0
      %v496 = vsel %vm495, %v490, -1e+09
      %v497 = vsel %vm448, %v496, -inf
      %498 = vmax.xlane.f32.xlu0 %v497
      %v499 = vpop.xlane.xlu0 %498
      %v500 = vsub.f32 %v496, %v499
      %v501 = vmul.f32 %v500, 1.442695
      %v502 = vpow.pop %v501
      %v503 = vsel %vm448, %v502, 0.0
      %504 = vadd.xlane.f32.xlu0 %v503
      %v505 = vpop.xlane.xlu0 %504
      %v506 = vrcp.pop %v505
      %v507 = vmul.f32 %v502, %v506
      %v508 = vpack.c.bf16 %v507, %v507
      %510 = vrot.lane.b32.xlu0 %v447, 96
      %v511 = vpop.permute.xlu0 %510
      %v513 = vsel %vm448, %v508, 0
      %vm515 = vcmask 1043456
      %v517 = vsel %vm515, %v511, 0
      %519 = vmatprep.subr.bf16.mxu0 0
      %520 = vmatpush1.bf16.msra.mxu0 %v517
      %521 = vmatprep.subr.bf16.mxu0 0
      %522 = vmatpush1.bf16.msra.mxu0 0
      %523 = vmatprep.subr.bf16.mxu0 0
      %524 = vmatpush1.bf16.msra.mxu0 0
      %525 = vmatprep.subr.bf16.mxu0 0
      %526 = vmatpush1.bf16.msra.mxu0 0
      %527 = vmatprep.subr.bf16.mxu0 0
      %528 = vmatpush1.bf16.msra.mxu0 0
      %529 = vmatprep.subr.bf16.mxu0 0
      %530 = vmatpush1.bf16.msra.mxu0 0
      %531 = vmatprep.subr.bf16.mxu0 0
      %532 = vmatpush1.bf16.msra.mxu0 0
      %533 = vmatprep.subr.bf16.mxu0 0
      %534 = vmatpush1.bf16.msra.mxu0 0
      %535 = vmatprep.subr.bf16.mxu0 0
      %536 = vmatpush1.bf16.msra.mxu0 0
      %537 = vmatprep.subr.bf16.mxu0 0
      %538 = vmatpush1.bf16.msra.mxu0 0
      %539 = vmatprep.subr.bf16.mxu0 0
      %540 = vmatpush1.bf16.msra.mxu0 0
      %541 = vmatprep.subr.bf16.mxu0 0
      %542 = vmatpush1.bf16.msra.mxu0 0
      %543 = vmatprep.subr.bf16.mxu0 0
      %544 = vmatpush1.bf16.msra.mxu0 0
      %545 = vmatprep.subr.bf16.mxu0 0
      %546 = vmatpush1.bf16.msra.mxu0 0
      %547 = vmatprep.subr.bf16.mxu0 0
      %548 = vmatpush1.bf16.msra.mxu0 0
      %549 = vmatprep.subr.bf16.mxu0 0
      %550 = vmatpush1.bf16.msra.mxu0 0
      %551 = vmatprep.mubr.bf16.mxu0 0
      %552 = vmatmul.mubr.bf16.gmra.mrb[0].mxu0 %v513
      %v553 = vpop.f32.mrb[0].mxu0
      %v554 = vadd.f32 0.0, %v553
      %v555 = vpop.f32.mrb[0].mxu0
      %v556 = vpop.f32.mrb[0].mxu0
      %v557 = vpop.f32.mrb[0].mxu0
      %558 = vdwg.mxu0
      %560 = vrot.lane.b32.xlu0 %v446, 120
      %v561 = vpop.permute.xlu0 %560
      %562 = vrot.lane.b32.xlu0 %v447, 120
      %v563 = vpop.permute.xlu0 %562
      %v565 = vsel %vm448, %v561, 0
      %v568 = vsel %vm448, %v563, 0
      %570 = vmatprep.subr.bf16.mxu0 0
      %571 = vmatpush1.bf16.xpose.msra.mxu0 %v568
      %572 = vmatprep.subr.bf16.mxu0 0
      %573 = vmatpush1.bf16.xpose.msra.mxu0 0
      %574 = vmatprep.subr.bf16.mxu0 0
      %575 = vmatpush1.bf16.xpose.msra.mxu0 0
      %576 = vmatprep.subr.bf16.mxu0 0
      %577 = vmatpush1.bf16.xpose.msra.mxu0 0
      %578 = vmatprep.subr.bf16.mxu0 0
      %579 = vmatpush1.bf16.xpose.msra.mxu0 0
      %580 = vmatprep.subr.bf16.mxu0 0
      %581 = vmatpush1.bf16.xpose.msra.mxu0 0
      %582 = vmatprep.subr.bf16.mxu0 0
      %583 = vmatpush1.bf16.xpose.msra.mxu0 0
      %584 = vmatprep.subr.bf16.mxu0 0
      %585 = vmatpush1.bf16.xpose.msra.mxu0 0
      %586 = vmatprep.subr.bf16.mxu0 0
      %587 = vmatpush1.bf16.xpose.msra.mxu0 0
      %588 = vmatprep.subr.bf16.mxu0 0
      %589 = vmatpush1.bf16.xpose.msra.mxu0 0
      %590 = vmatprep.subr.bf16.mxu0 0
      %591 = vmatpush1.bf16.xpose.msra.mxu0 0
      %592 = vmatprep.subr.bf16.mxu0 0
      %593 = vmatpush1.bf16.xpose.msra.mxu0 0
      %594 = vmatprep.subr.bf16.mxu0 0
      %595 = vmatpush1.bf16.xpose.msra.mxu0 0
      %596 = vmatprep.subr.bf16.mxu0 0
      %597 = vmatpush1.bf16.xpose.msra.mxu0 0
      %598 = vmatprep.subr.bf16.mxu0 0
      %599 = vmatpush1.bf16.xpose.msra.mxu0 0
      %600 = vmatprep.subr.bf16.mxu0 0
      %601 = vmatpush1.bf16.xpose.msra.mxu0 0
      %602 = vmatprep.mubr.bf16.mxu0 0
      %603 = vmatmul.mubr.bf16.gmra.mrb[0].mxu0 %v565
      %v604 = vpop.f32.mrb[0].mxu0
      %v605 = vadd.f32 0.0, %v604
      %v606 = vpop.f32.mrb[0].mxu0
      %v607 = vpop.f32.mrb[0].mxu0
      %v608 = vpop.f32.mrb[0].mxu0
      %609 = vdwg.mxu0
      %v610 = vsel %vm495, %v605, -1e+09
      %v611 = vsel %vm448, %v610, -inf
      %612 = vmax.xlane.f32.xlu0 %v611
      %v613 = vpop.xlane.xlu0 %612
      %v614 = vsub.f32 %v610, %v613
      %v615 = vmul.f32 %v614, 1.442695
      %v616 = vpow.pop %v615
      %v617 = vsel %vm448, %v616, 0.0
      %618 = vadd.xlane.f32.xlu0 %v617
      %v619 = vpop.xlane.xlu0 %618
      %v620 = vrcp.pop %v619
      %v621 = vmul.f32 %v616, %v620
      %v622 = vpack.c.bf16 %v621, %v621
      %623 = vrot.lane.b32.xlu0 %v447, 88
      %v624 = vpop.permute.xlu0 %623
      %v626 = vsel %vm448, %v622, 0
      %v629 = vsel %vm515, %v624, 0
      %631 = vmatprep.subr.bf16.mxu0 0
      %632 = vmatpush1.bf16.msra.mxu0 %v629
      %633 = vmatprep.subr.bf16.mxu0 0
      %634 = vmatpush1.bf16.msra.mxu0 0
      %635 = vmatprep.subr.bf16.mxu0 0
      %636 = vmatpush1.bf16.msra.mxu0 0
      %637 = vmatprep.subr.bf16.mxu0 0
      %638 = vmatpush1.bf16.msra.mxu0 0
      %639 = vmatprep.subr.bf16.mxu0 0
      %640 = vmatpush1.bf16.msra.mxu0 0
      %641 = vmatprep.subr.bf16.mxu0 0
      %642 = vmatpush1.bf16.msra.mxu0 0
      %643 = vmatprep.subr.bf16.mxu0 0
      %644 = vmatpush1.bf16.msra.mxu0 0
      %645 = vmatprep.subr.bf16.mxu0 0
      %646 = vmatpush1.bf16.msra.mxu0 0
      %647 = vmatprep.subr.bf16.mxu0 0
      %648 = vmatpush1.bf16.msra.mxu0 0
      %649 = vmatprep.subr.bf16.mxu0 0
      %650 = vmatpush1.bf16.msra.mxu0 0
      %651 = vmatprep.subr.bf16.mxu0 0
      %652 = vmatpush1.bf16.msra.mxu0 0
      %653 = vmatprep.subr.bf16.mxu0 0
      %654 = vmatpush1.bf16.msra.mxu0 0
      %655 = vmatprep.subr.bf16.mxu0 0
      %656 = vmatpush1.bf16.msra.mxu0 0
      %657 = vmatprep.subr.bf16.mxu0 0
      %658 = vmatpush1.bf16.msra.mxu0 0
      %659 = vmatprep.subr.bf16.mxu0 0
      %660 = vmatpush1.bf16.msra.mxu0 0
      %661 = vmatprep.subr.bf16.mxu0 0
      %662 = vmatpush1.bf16.msra.mxu0 0
      %663 = vmatprep.mubr.bf16.mxu0 0
      %664 = vmatmul.mubr.bf16.gmra.mrb[0].mxu0 %v626
      %v665 = vpop.f32.mrb[0].mxu0
      %v666 = vadd.f32 0.0, %v665
      %v667 = vpop.f32.mrb[0].mxu0
      %v668 = vpop.f32.mrb[0].mxu0
      %v669 = vpop.f32.mrb[0].mxu0
      %670 = vdwg.mxu0
      %671 = vrot.lane.b32.xlu0 %v446, 112
      %v672 = vpop.permute.xlu0 %671
      %673 = vrot.lane.b32.xlu0 %v447, 112
      %v674 = vpop.permute.xlu0 %673
      %v676 = vsel %vm448, %v672, 0
      %v679 = vsel %vm448, %v674, 0
      %681 = vmatprep.subr.bf16.mxu0 0
      %682 = vmatpush1.bf16.xpose.msra.mxu0 %v679
      %683 = vmatprep.subr.bf16.mxu0 0
      %684 = vmatpush1.bf16.xpose.msra.mxu0 0
      %685 = vmatprep.subr.bf16.mxu0 0
      %686 = vmatpush1.bf16.xpose.msra.mxu0 0
      %687 = vmatprep.subr.bf16.mxu0 0
      %688 = vmatpush1.bf16.xpose.msra.mxu0 0
      %689 = vmatprep.subr.bf16.mxu0 0
      %690 = vmatpush1.bf16.xpose.msra.mxu0 0
      %691 = vmatprep.subr.bf16.mxu0 0
      %692 = vmatpush1.bf16.xpose.msra.mxu0 0
      %693 = vmatprep.subr.bf16.mxu0 0
      %694 = vmatpush1.bf16.xpose.msra.mxu0 0
      %695 = vmatprep.subr.bf16.mxu0 0
      %696 = vmatpush1.bf16.xpose.msra.mxu0 0
      %697 = vmatprep.subr.bf16.mxu0 0
      %698 = vmatpush1.bf16.xpose.msra.mxu0 0
      %699 = vmatprep.subr.bf16.mxu0 0
      %700 = vmatpush1.bf16.xpose.msra.mxu0 0
      %701 = vmatprep.subr.bf16.mxu0 0
      %702 = vmatpush1.bf16.xpose.msra.mxu0 0
      %703 = vmatprep.subr.bf16.mxu0 0
      %704 = vmatpush1.bf16.xpose.msra.mxu0 0
      %705 = vmatprep.subr.bf16.mxu0 0
      %706 = vmatpush1.bf16.xpose.msra.mxu0 0
      %707 = vmatprep.subr.bf16.mxu0 0
      %708 = vmatpush1.bf16.xpose.msra.mxu0 0
      %709 = vmatprep.subr.bf16.mxu0 0
      %710 = vmatpush1.bf16.xpose.msra.mxu0 0
      %711 = vmatprep.subr.bf16.mxu0 0
      %712 = vmatpush1.bf16.xpose.msra.mxu0 0
      %713 = vmatprep.mubr.bf16.mxu0 0
      %714 = vmatmul.mubr.bf16.gmra.mrb[0].mxu0 %v676
      %v715 = vpop.f32.mrb[0].mxu0
      %v716 = vadd.f32 0.0, %v715
      %v717 = vpop.f32.mrb[0].mxu0
      %v718 = vpop.f32.mrb[0].mxu0
      %v719 = vpop.f32.mrb[0].mxu0
      %720 = vdwg.mxu0
      %v721 = vsel %vm495, %v716, -1e+09
      %v722 = vsel %vm448, %v721, -inf
      %723 = vmax.xlane.f32.xlu0 %v722
      %v724 = vpop.xlane.xlu0 %723
      %v725 = vsub.f32 %v721, %v724
      %v726 = vmul.f32 %v725, 1.442695
      %v727 = vpow.pop %v726
      %v728 = vsel %vm448, %v727, 0.0
      %729 = vadd.xlane.f32.xlu0 %v728
      %v730 = vpop.xlane.xlu0 %729
      %v731 = vrcp.pop %v730
      %v732 = vmul.f32 %v727, %v731
      %v733 = vpack.c.bf16 %v732, %v732
      %734 = vrot.lane.b32.xlu0 %v447, 80
      %v735 = vpop.permute.xlu0 %734
      %v737 = vsel %vm448, %v733, 0
      %v740 = vsel %vm515, %v735, 0
      %742 = vmatprep.subr.bf16.mxu0 0
      %743 = vmatpush1.bf16.msra.mxu0 %v740
      %744 = vmatprep.subr.bf16.mxu0 0
      %745 = vmatpush1.bf16.msra.mxu0 0
      %746 = vmatprep.subr.bf16.mxu0 0
      %747 = vmatpush1.bf16.msra.mxu0 0
      %748 = vmatprep.subr.bf16.mxu0 0
      %749 = vmatpush1.bf16.msra.mxu0 0
      %750 = vmatprep.subr.bf16.mxu0 0
      %751 = vmatpush1.bf16.msra.mxu0 0
      %752 = vmatprep.subr.bf16.mxu0 0
      %753 = vmatpush1.bf16.msra.mxu0 0
      %754 = vmatprep.subr.bf16.mxu0 0
      %755 = vmatpush1.bf16.msra.mxu0 0
      %756 = vmatprep.subr.bf16.mxu0 0
      %757 = vmatpush1.bf16.msra.mxu0 0
      %758 = vmatprep.subr.bf16.mxu0 0
      %759 = vmatpush1.bf16.msra.mxu0 0
      %760 = vmatprep.subr.bf16.mxu0 0
      %761 = vmatpush1.bf16.msra.mxu0 0
      %762 = vmatprep.subr.bf16.mxu0 0
      %763 = vmatpush1.bf16.msra.mxu0 0
      %764 = vmatprep.subr.bf16.mxu0 0
      %765 = vmatpush1.bf16.msra.mxu0 0
      %766 = vmatprep.subr.bf16.mxu0 0
      %767 = vmatpush1.bf16.msra.mxu0 0
      %768 = vmatprep.subr.bf16.mxu0 0
      %769 = vmatpush1.bf16.msra.mxu0 0
      %770 = vmatprep.subr.bf16.mxu0 0
      %771 = vmatpush1.bf16.msra.mxu0 0
      %772 = vmatprep.subr.bf16.mxu0 0
      %773 = vmatpush1.bf16.msra.mxu0 0
      %774 = vmatprep.mubr.bf16.mxu0 0
      %775 = vmatmul.mubr.bf16.gmra.mrb[0].mxu0 %v737
      %v776 = vpop.f32.mrb[0].mxu0
      %v777 = vadd.f32 0.0, %v776
      %v778 = vpop.f32.mrb[0].mxu0
      %v779 = vpop.f32.mrb[0].mxu0
      %v780 = vpop.f32.mrb[0].mxu0
      %781 = vdwg.mxu0
      %782 = vrot.lane.b32.xlu0 %v446, 104
      %v783 = vpop.permute.xlu0 %782
      %784 = vrot.lane.b32.xlu0 %v447, 104
      %v785 = vpop.permute.xlu0 %784
      %v787 = vsel %vm448, %v783, 0
      %v790 = vsel %vm448, %v785, 0
      %792 = vmatprep.subr.bf16.mxu0 0
      %793 = vmatpush1.bf16.xpose.msra.mxu0 %v790
      %794 = vmatprep.subr.bf16.mxu0 0
      %795 = vmatpush1.bf16.xpose.msra.mxu0 0
      %796 = vmatprep.subr.bf16.mxu0 0
      %797 = vmatpush1.bf16.xpose.msra.mxu0 0
      %798 = vmatprep.subr.bf16.mxu0 0
      %799 = vmatpush1.bf16.xpose.msra.mxu0 0
      %800 = vmatprep.subr.bf16.mxu0 0
      %801 = vmatpush1.bf16.xpose.msra.mxu0 0
      %802 = vmatprep.subr.bf16.mxu0 0
      %803 = vmatpush1.bf16.xpose.msra.mxu0 0
      %804 = vmatprep.subr.bf16.mxu0 0
      %805 = vmatpush1.bf16.xpose.msra.mxu0 0
      %806 = vmatprep.subr.bf16.mxu0 0
      %807 = vmatpush1.bf16.xpose.msra.mxu0 0
      %808 = vmatprep.subr.bf16.mxu0 0
      %809 = vmatpush1.bf16.xpose.msra.mxu0 0
      %810 = vmatprep.subr.bf16.mxu0 0
      %811 = vmatpush1.bf16.xpose.msra.mxu0 0
      %812 = vmatprep.subr.bf16.mxu0 0
      %813 = vmatpush1.bf16.xpose.msra.mxu0 0
      %814 = vmatprep.subr.bf16.mxu0 0
      %815 = vmatpush1.bf16.xpose.msra.mxu0 0
      %816 = vmatprep.subr.bf16.mxu0 0
      %817 = vmatpush1.bf16.xpose.msra.mxu0 0
      %818 = vmatprep.subr.bf16.mxu0 0
      %819 = vmatpush1.bf16.xpose.msra.mxu0 0
      %820 = vmatprep.subr.bf16.mxu0 0
      %821 = vmatpush1.bf16.xpose.msra.mxu0 0
      %822 = vmatprep.subr.bf16.mxu0 0
      %823 = vmatpush1.bf16.xpose.msra.mxu0 0
      %824 = vmatprep.mubr.bf16.mxu0 0
      %825 = vmatmul.mubr.bf16.gmra.mrb[0].mxu0 %v787
      %v826 = vpop.f32.mrb[0].mxu0
      %v827 = vadd.f32 0.0, %v826
      %v828 = vpop.f32.mrb[0].mxu0
      %v829 = vpop.f32.mrb[0].mxu0
      %v830 = vpop.f32.mrb[0].mxu0
      %831 = vdwg.mxu0
      %v832 = vsel %vm495, %v827, -1e+09
      %v833 = vsel %vm448, %v832, -inf
      %834 = vmax.xlane.f32.xlu0 %v833
      %v835 = vpop.xlane.xlu0 %834
      %v836 = vsub.f32 %v832, %v835
      %v837 = vmul.f32 %v836, 1.442695
      %v838 = vpow.pop %v837
      %v839 = vsel %vm448, %v838, 0.0
      %840 = vadd.xlane.f32.xlu0 %v839
      %v841 = vpop.xlane.xlu0 %840
      %v842 = vrcp.pop %v841
      %v843 = vmul.f32 %v838, %v842
      %v844 = vpack.c.bf16 %v843, %v843
      %845 = vrot.lane.b32.xlu0 %v447, 72
      %v846 = vpop.permute.xlu0 %845
      %v848 = vsel %vm448, %v844, 0
      %v851 = vsel %vm515, %v846, 0
      %853 = vmatprep.subr.bf16.mxu0 0
      %854 = vmatpush1.bf16.msra.mxu0 %v851
      %855 = vmatprep.subr.bf16.mxu0 0
      %856 = vmatpush1.bf16.msra.mxu0 0
      %857 = vmatprep.subr.bf16.mxu0 0
      %858 = vmatpush1.bf16.msra.mxu0 0
      %859 = vmatprep.subr.bf16.mxu0 0
      %860 = vmatpush1.bf16.msra.mxu0 0
      %861 = vmatprep.subr.bf16.mxu0 0
      %862 = vmatpush1.bf16.msra.mxu0 0
      %863 = vmatprep.subr.bf16.mxu0 0
      %864 = vmatpush1.bf16.msra.mxu0 0
      %865 = vmatprep.subr.bf16.mxu0 0
      %866 = vmatpush1.bf16.msra.mxu0 0
      %867 = vmatprep.subr.bf16.mxu0 0
      %868 = vmatpush1.bf16.msra.mxu0 0
      %869 = vmatprep.subr.bf16.mxu0 0
      %870 = vmatpush1.bf16.msra.mxu0 0
      %871 = vmatprep.subr.bf16.mxu0 0
      %872 = vmatpush1.bf16.msra.mxu0 0
      %873 = vmatprep.subr.bf16.mxu0 0
      %874 = vmatpush1.bf16.msra.mxu0 0
      %875 = vmatprep.subr.bf16.mxu0 0
      %876 = vmatpush1.bf16.msra.mxu0 0
      %877 = vmatprep.subr.bf16.mxu0 0
      %878 = vmatpush1.bf16.msra.mxu0 0
      %879 = vmatprep.subr.bf16.mxu0 0
      %880 = vmatpush1.bf16.msra.mxu0 0
      %881 = vmatprep.subr.bf16.mxu0 0
      %882 = vmatpush1.bf16.msra.mxu0 0
      %883 = vmatprep.subr.bf16.mxu0 0
      %884 = vmatpush1.bf16.msra.mxu0 0
      %885 = vmatprep.mubr.bf16.mxu0 0
      %886 = vmatmul.mubr.bf16.gmra.mrb[0].mxu0 %v848
      %v887 = vpop.f32.mrb[0].mxu0
      %v888 = vadd.f32 0.0, %v887
      %v889 = vpop.f32.mrb[0].mxu0
      %v890 = vpop.f32.mrb[0].mxu0
      %v891 = vpop.f32.mrb[0].mxu0
      %892 = vdwg.mxu0
      %894 = vrot.lane.b32.xlu0 %v666, 8
      %v895 = vpop.permute.xlu0 %894
      %898 = vrot.lane.b32.xlu0 %v777, 16
      %v899 = vpop.permute.xlu0 %898
      %902 = vrot.lane.b32.xlu0 %v888, 24
      %v903 = vpop.permute.xlu0 %902
      %v905 = vsel %vm448, %v554, %v895
      %vm906 = vcmask 130048
      %v907 = vsel %vm906, %v905, %v899
      %vm908 = vcmask 195584
      %v909 = vsel %vm908, %v907, %v903
      %v910 = vpack.c.bf16 %v909, %v909
      %vm911 = vcmask 257024
      %912 = vst.msk [vmem:[%s307] sm:$0xf] %vm911, %v910
      %p913 = scmp.lt.s32.totalorder %s18, 1
      %s914 = scalar_select %p913, %s18, 1
      %s915 = smul.addr %s914, 4
      %s916 = scalar_lea.vmem %s7, %s915
      // Predicated region
      $region49: #{decoder_forward.11} parent=47 // pred_check
        %p917 = pneg %p198
      $region50: #{decoder_forward.11} parent=47 // pred_check_branch
        %919 = sbr.rel (%p917) target = $region52
      $region51: #{decoder_forward.11} parent=47 // pred_region
        _
      $region52: #{decoder_forward.11} parent=47 // pred_fallthru
        _
    $region48: #{decoder_forward.11} parent=5 // pred_fallthru
      _
    %p920 = scmp.le.s32.totalorder 2, %s13
    // Predicated region
    $region53: #{decoder_forward.11} parent=5 // pred_check
      %p921 = pneg %p920
    $region54: #{decoder_forward.11} parent=5 // pred_check_branch
      %923 = sbr.rel (%p921) target = $region56
    $region55: #{decoder_forward.11} parent=5 // pred_region
      %s924 = ssub.s32 %s13, 2
      // Predicated region
      $region57: #{decoder_forward.11} parent=55 // pred_check
        %p925 = pneg %p204
      $region58: #{decoder_forward.11} parent=55 // pred_check_branch
        %927 = sbr.rel (%p925) target = $region60
      $region59: #{decoder_forward.11} parent=55 // pred_region
        %p928 = scmp.lt.s32.totalorder %s19, 1
        %s929 = scalar_select %p928, %s19, 1
        %s930 = smul.addr %s929, 4
        %s931 = scalar_lea.vmem %s7, %s930
      $region60: #{decoder_forward.11} parent=55 // pred_fallthru
        _
    $region56: #{decoder_forward.11} parent=5 // pred_fallthru
      _
  $region6: #{decoder_forward.11} parent=0 // loop_footer
    %s17 = sadd.s32 1, %s13
  $region7: #{decoder_forward.11} parent=0 // loop_footer_branch
    %12 = sbr.rel target = $region3
  $region8: #{decoder_forward.11} parent=0 // loop_exit
    _

</llo_original>
